<compile_context>
chip_gen: v5e
topology: v5e:2x2
jax: 0.10.0
libtpu: 0.0.40
codegen_flags: <defaults>
</compile_context>

<pallas_src>
import functools

import jax
import jax.numpy as jnp
from jax.experimental import pallas as pl
from jax.experimental.pallas import tpu as pltpu


# --------------------------------- kernel ------------------------------------

def _attention_layer_kernel(q_ref, k_ref, v_ref, wqkv_ref, wo_ref, b_ref,
                            o_ref, *, n_heads, d_keys, d_values,
                            block_b, q_len, kv_len, matmul_dtype, approx_recip):
    """One grid step: `block_b` batch elements of the full AttentionLayer forward."""
    f32 = jnp.float32
    H, dk, dv = n_heads, d_keys, d_values
    hdk, hdv = H * dk, H * dv
    d_model = wo_ref.shape[1]
    cast = lambda t: t.astype(matmul_dtype)

    # --- packed constant operands --------------------------------------------
    wq = wqkv_ref[0]                       # (d_model, H*dk)  (matmul_dtype)
    wk = wqkv_ref[1]
    wv = wqkv_ref[2]
    bq = b_ref[0:1, :hdk]                  # (1, H*dk)  float32
    bk = b_ref[1:2, :hdk]
    bv = b_ref[2:3, :hdv]
    bo = b_ref[3:4, :d_model]

    # --- Q/K/V projections: M = block_b * seq (large-M MXU matmuls) ----------
    qp = jnp.dot(q_ref[...], wq, preferred_element_type=f32) + bq   # (B*L, H*dk)
    kp = jnp.dot(k_ref[...], wk, preferred_element_type=f32) + bk   # (B*S, H*dk)
    vp = jnp.dot(v_ref[...], wv, preferred_element_type=f32) + bv   # (B*S, H*dv)

    # FullAttention scale = 1/sqrt(E); fold it into Q once (f32 VPU).
    qp = qp * (1.0 / (dk ** 0.5))

    q3 = qp.reshape(block_b, q_len, hdk)     # view: q_len % 8 == 0
    k3 = kp.reshape(block_b, kv_len, hdk)
    v3 = vp.reshape(block_b, kv_len, hdv)

    # --- per-head attention, batched over the block_b rows -------------------
    # NOTE: with small S only S of 128 lanes are active in the softmax; pad S
    # toward 128 upstream on real workloads.
    head_outs = []
    for h in range(H):                                     # static unroll
        qh = q3[:, :, h * dk:(h + 1) * dk]
        kh = k3[:, :, h * dk:(h + 1) * dk]
        vh = v3[:, :, h * dv:(h + 1) * dv]
        s = jnp.einsum('bld,bsd->bls', cast(qh), cast(kh),
                       preferred_element_type=f32)         # (B, L, S)
        m = jnp.max(s, axis=-1, keepdims=True)
        p = jnp.exp(s - m)                                 # f32 EUP
        denom = jnp.sum(p, axis=-1, keepdims=True)
        if approx_recip:
            a = p * pl.reciprocal(denom, approx=True)      # EUP slot
        else:
            a = p / denom
        oh = jnp.einsum('bls,bsd->bld', cast(a), cast(vh),
                        preferred_element_type=f32)        # (B, L, dv)
        head_outs.append(oh)

    # Concatenate head outputs along lanes -> (block_b*L, H*dv) so the output
    # projection is ONE K = H*dv matmul (MXU-filling) instead of H K=dv dots.
    ho = jnp.concatenate(head_outs, axis=-1).reshape(block_b * q_len, hdv)
    out = jnp.dot(cast(ho), wo_ref[...], preferred_element_type=f32) + bo
    o_ref[...] = out.astype(o_ref.dtype)                   # lane-dense slab store


# -------------------------------- wrapper -------------------------------------

def _tpu_vmem_capacity_bytes():
    """Best-effort physical VMEM query; conservative fallback (v7x-like)."""
    try:
        info = pltpu.get_tpu_info()
        cap = int(getattr(info, "vmem_capacity_bytes"))
        if cap > 0:
            return cap
    except Exception:
        pass
    return 64 * 1024 * 1024


def _block_vmem_bytes(d, L, S, d_model, hdk, hdv, mm_bytes, out_bytes):
    """Rough per-grid-step VMEM estimate (double-buffered I/O + intermediates)."""
    rows_q, rows_kv = d * L, d * S
    io = 2 * (rows_q + 2 * rows_kv) * d_model * mm_bytes         # q,k,v blocks x2
    io += 2 * rows_q * d_model * out_bytes                       # out block x2
    w = 2 * (3 * d_model * hdk + hdv * d_model) * mm_bytes       # weights x2
    w += 2 * 8 * max(hdk, hdv, d_model) * 4                      # bias slab x2
    inter = (rows_q * hdk + rows_kv * hdk + rows_kv * hdv) * 4   # qp/kp/vp f32
    inter += d * L * S * 4 * 2                                   # scores + probs
    inter += rows_q * hdv * 4 + rows_q * d_model * 4             # head slab + out
    return io + w + inter


def _pick_block_b(B, L, S, *, row_multiple, max_block_rows, prefer_multi_step,
                  fits):
    """Largest batch block with tile-aligned rows that fits the VMEM budget."""
    divisors = [d for d in range(1, B + 1) if B % d == 0]
    ok = [d for d in divisors
          if (d * L) % row_multiple == 0 and (d * S) % row_multiple == 0
          and d * max(L, S) <= max_block_rows and fits(d)]
    if not ok:
        return B                       # whole batch in one block (always legal)
    if prefer_multi_step:              # v7x: keep both TensorCores busy
        multi = [d for d in ok if B // d >= 2]
        if multi:
            return max(multi)
    return max(ok)


def attention_layer(queries, keys, values, params, n_heads, attn_mask=None,
                    *, block_b=None, matmul_dtype=jnp.bfloat16,
                    approx_reciprocal=True, single_buffer_weights=False,
                    interpret=False):
    """queries (B,L,D), keys/values (B,S,D) -> (out (B,L,D), None)."""
    del attn_mask  # TODO(synk): masking not implemented (mask_flag=False path).
    B, L, d_model = queries.shape
    Bk, S, _ = keys.shape
    assert Bk == B and values.shape[0] == B and values.shape[1] == S

    hdk = params["wq"].shape[1]
    hdv = params["wv"].shape[1]
    d_keys = hdk // n_heads
    d_values = hdv // n_heads
    assert hdk == n_heads * d_keys and hdv == n_heads * d_values
    assert d_keys == d_values, "stacked QKV weights require d_keys == d_values"
    assert params["wo"].shape == (hdv, d_model)

    mm_bytes = jnp.dtype(matmul_dtype).itemsize
    out_bytes = jnp.dtype(queries.dtype).itemsize

    # --- generation-aware defaults -------------------------------------------
    vmem_cap = _tpu_vmem_capacity_bytes()
    single_tc_like = vmem_cap >= 100 * 1024 * 1024      # v5e/v6e: 128 MiB, 1 TC
    if single_tc_like:
        max_block_rows, prefer_multi_step = 2048, False
        vmem_limit = min(96 * 1024 * 1024, int(vmem_cap * 0.8))
    else:                                               # v7x-like: 64 MiB, 2 TCs
        max_block_rows, prefer_multi_step = 512, True
        vmem_limit = min(48 * 1024 * 1024, int(vmem_cap * 0.8))

    # bf16 min tile is (16,128); f32 is (8,128).
    row_multiple = 16 if mm_bytes < 4 else 8

    def fits(d):
        return _block_vmem_bytes(d, L, S, d_model, hdk, hdv,
                                 mm_bytes, out_bytes) <= 0.6 * vmem_limit

    if block_b is None:
        block_b = _pick_block_b(B, L, S, row_multiple=row_multiple,
                                max_block_rows=max_block_rows,
                                prefer_multi_step=prefer_multi_step, fits=fits)
    assert B % block_b == 0
    grid = (B // block_b,)

    # Flatten (B, seq, d_model) -> (B*seq, d_model): each kernel block is one
    # large contiguous row slab (lane-dense when d_model % 128 == 0).
    q2 = queries.reshape(B * L, d_model).astype(matmul_dtype)
    k2 = keys.reshape(B * S, d_model).astype(matmul_dtype)
    v2 = values.reshape(B * S, d_model).astype(matmul_dtype)

    # Pack constant operands: one stacked QKV weight, one bias slab.
    wqkv = jnp.stack([params["wq"], params["wk"], params["wv"]],
                     axis=0).astype(matmul_dtype)                  # (3, D, H*dk)
    wo = params["wo"].astype(matmul_dtype)                         # (H*dv, D)
    W = max(hdk, hdv, d_model)

    def _row(b):
        b = jnp.asarray(b, jnp.float32).reshape(1, -1)
        return jnp.pad(b, ((0, 0), (0, W - b.shape[1])))

    b_packed = jnp.concatenate(
        [_row(params["bq"]), _row(params["bk"]), _row(params["bv"]),
         _row(params["bo"]), jnp.zeros((4, W), jnp.float32)], axis=0)  # (8, W)

    kernel = functools.partial(
        _attention_layer_kernel, n_heads=n_heads, d_keys=d_keys,
        d_values=d_values, block_b=block_b, q_len=L, kv_len=S,
        matmul_dtype=matmul_dtype, approx_recip=approx_reciprocal)

    # Constant operands: optionally single-buffered (they never change with i).
    const_kw = {"pipeline_mode": pl.Buffered(1)} if single_buffer_weights else {}
    wqkv_spec = pl.BlockSpec((3, d_model, hdk), lambda i: (0, 0, 0), **const_kw)
    wo_spec = pl.BlockSpec((hdv, d_model), lambda i: (0, 0), **const_kw)
    b_spec = pl.BlockSpec((8, W), lambda i: (0, 0), **const_kw)

    flops = 2 * B * (L * d_model * hdk + S * d_model * hdk + S * d_model * hdv
                     + n_heads * L * S * d_keys + n_heads * L * S * d_values
                     + L * hdv * d_model)
    bytes_accessed = (B * (L + 2 * S) * d_model * mm_bytes
                      + (3 * d_model * hdk + hdv * d_model) * mm_bytes
                      + 8 * W * 4 + B * L * d_model * out_bytes)
    cost = pl.CostEstimate(flops=int(flops),
                           transcendentals=int(B * n_heads * L * S),
                           bytes_accessed=int(bytes_accessed))

    out2 = pl.pallas_call(
        kernel,
        out_shape=jax.ShapeDtypeStruct((B * L, d_model), queries.dtype),
        grid_spec=pltpu.PrefetchScalarGridSpec(
            num_scalar_prefetch=0,
            grid=grid,
            in_specs=[
                pl.BlockSpec((block_b * L, d_model), lambda i: (i, 0)),  # Q rows
                pl.BlockSpec((block_b * S, d_model), lambda i: (i, 0)),  # K rows
                pl.BlockSpec((block_b * S, d_model), lambda i: (i, 0)),  # V rows
                wqkv_spec,                                               # wq|wk|wv
                wo_spec,                                                 # wo
                b_spec,                                                  # biases
            ],
            out_specs=pl.BlockSpec((block_b * L, d_model), lambda i: (i, 0)),
        ),
        compiler_params=pltpu.CompilerParams(
            dimension_semantics=("parallel",),
            vmem_limit_bytes=vmem_limit),
        cost_estimate=cost,
        interpret=interpret,
    )(q2, k2, v2, wqkv, wo, b_packed)

    return out2.reshape(B, L, d_model), None


# ----------------------------- reference & init --------------------------------

def attention_layer_reference(queries, keys, values, params, n_heads):
    """Pure-JAX reference of the PyTorch AttentionLayer forward (no mask)."""
    B, L, _ = queries.shape
    S = keys.shape[1]
    H = n_heads
    q = queries @ params["wq"] + params["bq"]
    k = keys @ params["wk"] + params["bk"]
    v = values @ params["wv"] + params["bv"]
    dk = q.shape[-1] // H
    dv = v.shape[-1] // H
    q = q.reshape(B, L, H, dk)
    k = k.reshape(B, S, H, dk)
    v = v.reshape(B, S, H, dv)
    s = jnp.einsum("blhe,bshe->bhls", q, k) * (1.0 / (dk ** 0.5))
    a = jax.nn.softmax(s, axis=-1)
    o = jnp.einsum("bhls,bshd->blhd", a, v).reshape(B, L, H * dv)
    return o @ params["wo"] + params["bo"], None


def init_params(key, d_model, n_heads, d_keys=None, d_values=None):
    d_keys = d_keys or d_model // n_heads
    d_values = d_values or d_model // n_heads
    ks = jax.random.split(key, 8)
    n = lambda k, s: (0.02 * jax.random.normal(k, s)).astype(jnp.float32)
    return {
        "wq": n(ks[0], (d_model, n_heads * d_keys)),
        "bq": n(ks[1], (n_heads * d_keys,)),
        "wk": n(ks[2], (d_model, n_heads * d_keys)),
        "bk": n(ks[3], (n_heads * d_keys,)),
        "wv": n(ks[4], (d_model, n_heads * d_values)),
        "bv": n(ks[5], (n_heads * d_values,)),
        "wo": n(ks[6], (n_heads * d_values, d_model)),
        "bo": n(ks[7], (d_model,)),
    }


if __name__ == "__main__":
    B, L, S, d_model, n_heads = 4, 8, 16, 128, 4

    key = jax.random.PRNGKey(0)
    kq, kk, kv, kp = jax.random.split(key, 4)
    queries = jax.random.normal(kq, (B, L, d_model), dtype=jnp.float32)
    keys = jax.random.normal(kk, (B, S, d_model), dtype=jnp.float32)
    values = jax.random.normal(kv, (B, S, d_model), dtype=jnp.float32)
    params = init_params(kp, d_model, n_heads)

    ref, _ = attention_layer_reference(queries, keys, values, params, n_heads)

    # Default path: bf16 MXU inputs, f32 accumulation, approx reciprocal.
    out, attn = attention_layer(queries, keys, values, params, n_heads)
    out = jax.block_until_ready(out)
    assert out.shape == (B, L, d_model)
    assert attn is None
    assert bool(jnp.all(jnp.isfinite(out)))
    max_err_bf16 = float(jnp.max(jnp.abs(out - ref)))
    assert bool(jnp.allclose(out, ref, rtol=3e-2, atol=3e-2)), max_err_bf16

    # Strict path: f32 matmul inputs, exact softmax division.
    out32, _ = attention_layer(queries, keys, values, params, n_heads,
                               matmul_dtype=jnp.float32,
                               approx_reciprocal=False)
    out32 = jax.block_until_ready(out32)
    max_err_f32 = float(jnp.max(jnp.abs(out32 - ref)))
    assert bool(jnp.allclose(out32, ref, rtol=1e-2, atol=1e-2)), max_err_f32

    print("KERNEL_OK")
</pallas_src>

<mosaic_0001>
module attributes {stable_mosaic.version = 11 : i64} {
  func.func @_attention_layer_kernel(%arg0: i32, %arg1: memref<16x128xbf16, #tpu.memory_space<vmem>>, %arg2: memref<32x128xbf16, #tpu.memory_space<vmem>>, %arg3: memref<32x128xbf16, #tpu.memory_space<vmem>>, %arg4: memref<3x128x128xbf16, #tpu.memory_space<vmem>>, %arg5: memref<128x128xbf16, #tpu.memory_space<vmem>>, %arg6: memref<8x128xf32, #tpu.memory_space<vmem>>, %arg7: memref<16x128xf32, #tpu.memory_space<vmem>>) attributes {dimension_semantics = [#tpu.dimension_semantics<parallel>], iteration_bounds = array<i64: 2>, scalar_prefetch = 0 : i64, scratch_operands = 0 : i64, tpu.core_type = #tpu.core_type<tc>, window_params = [{transform_indices = @transform_0, window_bounds = array<i64: 16, 128>}, {transform_indices = @transform_1, window_bounds = array<i64: 32, 128>}, {transform_indices = @transform_2, window_bounds = array<i64: 32, 128>}, {pipeline_mode = #tpu.pipeline_mode<synchronous>, transform_indices = @transform_3, window_bounds = array<i64: 3, 128, 128>}, {pipeline_mode = #tpu.pipeline_mode<synchronous>, transform_indices = @transform_4, window_bounds = array<i64: 128, 128>}, {pipeline_mode = #tpu.pipeline_mode<synchronous>, transform_indices = @transform_5, window_bounds = array<i64: 8, 128>}, {transform_indices = @transform_6, window_bounds = array<i64: 16, 128>}]} {
    %c0 = arith.constant 0 : index
    %c0_0 = arith.constant 0 : index
    %c0_1 = arith.constant 0 : index
    %0 = vector.load %arg4[%c0, %c0_0, %c0_1] : memref<3x128x128xbf16, #tpu.memory_space<vmem>>, vector<1x128x128xbf16>
    %1 = vector.shape_cast %0 : vector<1x128x128xbf16> to vector<128x128xbf16>
    %c1 = arith.constant 1 : index
    %c0_2 = arith.constant 0 : index
    %c0_3 = arith.constant 0 : index
    %2 = vector.load %arg4[%c1, %c0_2, %c0_3] : memref<3x128x128xbf16, #tpu.memory_space<vmem>>, vector<1x128x128xbf16>
    %3 = vector.shape_cast %2 : vector<1x128x128xbf16> to vector<128x128xbf16>
    %c2 = arith.constant 2 : index
    %c0_4 = arith.constant 0 : index
    %c0_5 = arith.constant 0 : index
    %4 = vector.load %arg4[%c2, %c0_4, %c0_5] : memref<3x128x128xbf16, #tpu.memory_space<vmem>>, vector<1x128x128xbf16>
    %5 = vector.shape_cast %4 : vector<1x128x128xbf16> to vector<128x128xbf16>
    %c0_6 = arith.constant 0 : index
    %c0_7 = arith.constant 0 : index
    %6 = vector.load %arg6[%c0_6, %c0_7] : memref<8x128xf32, #tpu.memory_space<vmem>>, vector<1x128xf32>
    %c1_8 = arith.constant 1 : index
    %c0_9 = arith.constant 0 : index
    %7 = vector.load %arg6[%c1_8, %c0_9] : memref<8x128xf32, #tpu.memory_space<vmem>>, vector<1x128xf32>
    %c2_10 = arith.constant 2 : index
    %c0_11 = arith.constant 0 : index
    %8 = vector.load %arg6[%c2_10, %c0_11] : memref<8x128xf32, #tpu.memory_space<vmem>>, vector<1x128xf32>
    %c3 = arith.constant 3 : index
    %c0_12 = arith.constant 0 : index
    %9 = vector.load %arg6[%c3, %c0_12] : memref<8x128xf32, #tpu.memory_space<vmem>>, vector<1x128xf32>
    %c0_13 = arith.constant 0 : index
    %c0_14 = arith.constant 0 : index
    %10 = vector.load %arg1[%c0_13, %c0_14] : memref<16x128xbf16, #tpu.memory_space<vmem>>, vector<16x128xbf16>
    %cst = arith.constant dense<0.000000e+00> : vector<16x128xf32>
    %11 = tpu.matmul %10, %1, %cst {dimension_numbers = #tpu.dot_dimension_numbers<[1], [0], [0], [1], [0, 0, 1, 1], [], []>} : vector<16x128xbf16>, vector<128x128xbf16>, vector<16x128xf32> -> vector<16x128xf32>
    %12 = vector.broadcast %6 : vector<1x128xf32> to vector<16x128xf32>
    %13 = arith.addf %11, %12 : vector<16x128xf32>
    %c0_15 = arith.constant 0 : index
    %c0_16 = arith.constant 0 : index
    %14 = vector.load %arg2[%c0_15, %c0_16] : memref<32x128xbf16, #tpu.memory_space<vmem>>, vector<32x128xbf16>
    %cst_17 = arith.constant dense<0.000000e+00> : vector<32x128xf32>
    %15 = tpu.matmul %14, %3, %cst_17 {dimension_numbers = #tpu.dot_dimension_numbers<[1], [0], [0], [1], [0, 0, 1, 1], [], []>} : vector<32x128xbf16>, vector<128x128xbf16>, vector<32x128xf32> -> vector<32x128xf32>
    %16 = vector.broadcast %7 : vector<1x128xf32> to vector<32x128xf32>
    %17 = arith.addf %15, %16 : vector<32x128xf32>
    %c0_18 = arith.constant 0 : index
    %c0_19 = arith.constant 0 : index
    %18 = vector.load %arg3[%c0_18, %c0_19] : memref<32x128xbf16, #tpu.memory_space<vmem>>, vector<32x128xbf16>
    %cst_20 = arith.constant dense<0.000000e+00> : vector<32x128xf32>
    %19 = tpu.matmul %18, %5, %cst_20 {dimension_numbers = #tpu.dot_dimension_numbers<[1], [0], [0], [1], [0, 0, 1, 1], [], []>} : vector<32x128xbf16>, vector<128x128xbf16>, vector<32x128xf32> -> vector<32x128xf32>
    %20 = vector.broadcast %8 : vector<1x128xf32> to vector<32x128xf32>
    %21 = arith.addf %19, %20 : vector<32x128xf32>
    %cst_21 = arith.constant 0.176776692 : f32
    %22 = vector.broadcast %cst_21 : f32 to vector<16x128xf32>
    %23 = arith.mulf %13, %22 : vector<16x128xf32>
    %24 = vector.shape_cast %23 : vector<16x128xf32> to vector<2x8x128xf32>
    %25 = vector.shape_cast %17 : vector<32x128xf32> to vector<2x16x128xf32>
    %26 = vector.shape_cast %21 : vector<32x128xf32> to vector<2x16x128xf32>
    %27 = vector.extract_strided_slice %24 {offsets = [0, 0, 0], sizes = [2, 8, 32], strides = [1, 1, 1]} : vector<2x8x128xf32> to vector<2x8x32xf32>
    %28 = vector.extract_strided_slice %25 {offsets = [0, 0, 0], sizes = [2, 16, 32], strides = [1, 1, 1]} : vector<2x16x128xf32> to vector<2x16x32xf32>
    %29 = vector.extract_strided_slice %26 {offsets = [0, 0, 0], sizes = [2, 16, 32], strides = [1, 1, 1]} : vector<2x16x128xf32> to vector<2x16x32xf32>
    %30 = arith.truncf %27 : vector<2x8x32xf32> to vector<2x8x32xbf16>
    %31 = arith.truncf %28 : vector<2x16x32xf32> to vector<2x16x32xbf16>
    "tpu.trace_start"() <{level = 10 : i32, message = "bld,bsd->bls"}> : () -> ()
    %cst_22 = arith.constant dense<0.000000e+00> : vector<2x8x16xf32>
    %32 = tpu.matmul %30, %31, %cst_22 {dimension_numbers = #tpu.dot_dimension_numbers<[2], [2], [1], [1], [0, 0, 0, 1, 1, 1], [0], [0]>} : vector<2x8x32xbf16>, vector<2x16x32xbf16>, vector<2x8x16xf32> -> vector<2x8x16xf32>
    "tpu.trace_stop"() : () -> ()
    %cst_23 = arith.constant dense<0xFF800000> : vector<2x8xf32>
    %33 = vector.multi_reduction <maximumf>, %32, %cst_23 [2] : vector<2x8x16xf32> to vector<2x8xf32>
    %34 = vector.shape_cast %33 : vector<2x8xf32> to vector<2x8x1xf32>
    %35 = vector.broadcast %34 : vector<2x8x1xf32> to vector<2x8x16xf32>
    %36 = arith.subf %32, %35 : vector<2x8x16xf32>
    %37 = math.exp %36 : vector<2x8x16xf32>
    %cst_24 = arith.constant dense<0.000000e+00> : vector<2x8xf32>
    %38 = vector.multi_reduction <add>, %37, %cst_24 [2] : vector<2x8x16xf32> to vector<2x8xf32>
    %39 = vector.shape_cast %38 : vector<2x8xf32> to vector<2x8x1xf32>
    %40 = tpu.reciprocal %39 {approx = true} : vector<2x8x1xf32> -> vector<2x8x1xf32>
    %41 = vector.broadcast %40 : vector<2x8x1xf32> to vector<2x8x16xf32>
    %42 = arith.mulf %37, %41 : vector<2x8x16xf32>
    %43 = arith.truncf %42 : vector<2x8x16xf32> to vector<2x8x16xbf16>
    %44 = arith.truncf %29 : vector<2x16x32xf32> to vector<2x16x32xbf16>
    "tpu.trace_start"() <{level = 10 : i32, message = "bls,bsd->bld"}> : () -> ()
    %cst_25 = arith.constant dense<0.000000e+00> : vector<2x8x32xf32>
    %45 = tpu.matmul %43, %44, %cst_25 {dimension_numbers = #tpu.dot_dimension_numbers<[2], [1], [1], [2], [0, 0, 0, 1, 1, 2], [0], [0]>} : vector<2x8x16xbf16>, vector<2x16x32xbf16>, vector<2x8x32xf32> -> vector<2x8x32xf32>
    "tpu.trace_stop"() : () -> ()
    %46 = vector.extract_strided_slice %24 {offsets = [0, 0, 32], sizes = [2, 8, 32], strides = [1, 1, 1]} : vector<2x8x128xf32> to vector<2x8x32xf32>
    %47 = vector.extract_strided_slice %25 {offsets = [0, 0, 32], sizes = [2, 16, 32], strides = [1, 1, 1]} : vector<2x16x128xf32> to vector<2x16x32xf32>
    %48 = vector.extract_strided_slice %26 {offsets = [0, 0, 32], sizes = [2, 16, 32], strides = [1, 1, 1]} : vector<2x16x128xf32> to vector<2x16x32xf32>
    %49 = arith.truncf %46 : vector<2x8x32xf32> to vector<2x8x32xbf16>
    %50 = arith.truncf %47 : vector<2x16x32xf32> to vector<2x16x32xbf16>
    "tpu.trace_start"() <{level = 10 : i32, message = "bld,bsd->bls"}> : () -> ()
    %cst_26 = arith.constant dense<0.000000e+00> : vector<2x8x16xf32>
    %51 = tpu.matmul %49, %50, %cst_26 {dimension_numbers = #tpu.dot_dimension_numbers<[2], [2], [1], [1], [0, 0, 0, 1, 1, 1], [0], [0]>} : vector<2x8x32xbf16>, vector<2x16x32xbf16>, vector<2x8x16xf32> -> vector<2x8x16xf32>
    "tpu.trace_stop"() : () -> ()
    %cst_27 = arith.constant dense<0xFF800000> : vector<2x8xf32>
    %52 = vector.multi_reduction <maximumf>, %51, %cst_27 [2] : vector<2x8x16xf32> to vector<2x8xf32>
    %53 = vector.shape_cast %52 : vector<2x8xf32> to vector<2x8x1xf32>
    %54 = vector.broadcast %53 : vector<2x8x1xf32> to vector<2x8x16xf32>
    %55 = arith.subf %51, %54 : vector<2x8x16xf32>
    %56 = math.exp %55 : vector<2x8x16xf32>
    %cst_28 = arith.constant dense<0.000000e+00> : vector<2x8xf32>
    %57 = vector.multi_reduction <add>, %56, %cst_28 [2] : vector<2x8x16xf32> to vector<2x8xf32>
    %58 = vector.shape_cast %57 : vector<2x8xf32> to vector<2x8x1xf32>
    %59 = tpu.reciprocal %58 {approx = true} : vector<2x8x1xf32> -> vector<2x8x1xf32>
    %60 = vector.broadcast %59 : vector<2x8x1xf32> to vector<2x8x16xf32>
    %61 = arith.mulf %56, %60 : vector<2x8x16xf32>
    %62 = arith.truncf %61 : vector<2x8x16xf32> to vector<2x8x16xbf16>
    %63 = arith.truncf %48 : vector<2x16x32xf32> to vector<2x16x32xbf16>
    "tpu.trace_start"() <{level = 10 : i32, message = "bls,bsd->bld"}> : () -> ()
    %cst_29 = arith.constant dense<0.000000e+00> : vector<2x8x32xf32>
    %64 = tpu.matmul %62, %63, %cst_29 {dimension_numbers = #tpu.dot_dimension_numbers<[2], [1], [1], [2], [0, 0, 0, 1, 1, 2], [0], [0]>} : vector<2x8x16xbf16>, vector<2x16x32xbf16>, vector<2x8x32xf32> -> vector<2x8x32xf32>
    "tpu.trace_stop"() : () -> ()
    %65 = vector.extract_strided_slice %24 {offsets = [0, 0, 64], sizes = [2, 8, 32], strides = [1, 1, 1]} : vector<2x8x128xf32> to vector<2x8x32xf32>
    %66 = vector.extract_strided_slice %25 {offsets = [0, 0, 64], sizes = [2, 16, 32], strides = [1, 1, 1]} : vector<2x16x128xf32> to vector<2x16x32xf32>
    %67 = vector.extract_strided_slice %26 {offsets = [0, 0, 64], sizes = [2, 16, 32], strides = [1, 1, 1]} : vector<2x16x128xf32> to vector<2x16x32xf32>
    %68 = arith.truncf %65 : vector<2x8x32xf32> to vector<2x8x32xbf16>
    %69 = arith.truncf %66 : vector<2x16x32xf32> to vector<2x16x32xbf16>
    "tpu.trace_start"() <{level = 10 : i32, message = "bld,bsd->bls"}> : () -> ()
    %cst_30 = arith.constant dense<0.000000e+00> : vector<2x8x16xf32>
    %70 = tpu.matmul %68, %69, %cst_30 {dimension_numbers = #tpu.dot_dimension_numbers<[2], [2], [1], [1], [0, 0, 0, 1, 1, 1], [0], [0]>} : vector<2x8x32xbf16>, vector<2x16x32xbf16>, vector<2x8x16xf32> -> vector<2x8x16xf32>
    "tpu.trace_stop"() : () -> ()
    %cst_31 = arith.constant dense<0xFF800000> : vector<2x8xf32>
    %71 = vector.multi_reduction <maximumf>, %70, %cst_31 [2] : vector<2x8x16xf32> to vector<2x8xf32>
    %72 = vector.shape_cast %71 : vector<2x8xf32> to vector<2x8x1xf32>
    %73 = vector.broadcast %72 : vector<2x8x1xf32> to vector<2x8x16xf32>
    %74 = arith.subf %70, %73 : vector<2x8x16xf32>
    %75 = math.exp %74 : vector<2x8x16xf32>
    %cst_32 = arith.constant dense<0.000000e+00> : vector<2x8xf32>
    %76 = vector.multi_reduction <add>, %75, %cst_32 [2] : vector<2x8x16xf32> to vector<2x8xf32>
    %77 = vector.shape_cast %76 : vector<2x8xf32> to vector<2x8x1xf32>
    %78 = tpu.reciprocal %77 {approx = true} : vector<2x8x1xf32> -> vector<2x8x1xf32>
    %79 = vector.broadcast %78 : vector<2x8x1xf32> to vector<2x8x16xf32>
    %80 = arith.mulf %75, %79 : vector<2x8x16xf32>
    %81 = arith.truncf %80 : vector<2x8x16xf32> to vector<2x8x16xbf16>
    %82 = arith.truncf %67 : vector<2x16x32xf32> to vector<2x16x32xbf16>
    "tpu.trace_start"() <{level = 10 : i32, message = "bls,bsd->bld"}> : () -> ()
    %cst_33 = arith.constant dense<0.000000e+00> : vector<2x8x32xf32>
    %83 = tpu.matmul %81, %82, %cst_33 {dimension_numbers = #tpu.dot_dimension_numbers<[2], [1], [1], [2], [0, 0, 0, 1, 1, 2], [0], [0]>} : vector<2x8x16xbf16>, vector<2x16x32xbf16>, vector<2x8x32xf32> -> vector<2x8x32xf32>
    "tpu.trace_stop"() : () -> ()
    %84 = vector.extract_strided_slice %24 {offsets = [0, 0, 96], sizes = [2, 8, 32], strides = [1, 1, 1]} : vector<2x8x128xf32> to vector<2x8x32xf32>
    %85 = vector.extract_strided_slice %25 {offsets = [0, 0, 96], sizes = [2, 16, 32], strides = [1, 1, 1]} : vector<2x16x128xf32> to vector<2x16x32xf32>
    %86 = vector.extract_strided_slice %26 {offsets = [0, 0, 96], sizes = [2, 16, 32], strides = [1, 1, 1]} : vector<2x16x128xf32> to vector<2x16x32xf32>
    %87 = arith.truncf %84 : vector<2x8x32xf32> to vector<2x8x32xbf16>
    %88 = arith.truncf %85 : vector<2x16x32xf32> to vector<2x16x32xbf16>
    "tpu.trace_start"() <{level = 10 : i32, message = "bld,bsd->bls"}> : () -> ()
    %cst_34 = arith.constant dense<0.000000e+00> : vector<2x8x16xf32>
    %89 = tpu.matmul %87, %88, %cst_34 {dimension_numbers = #tpu.dot_dimension_numbers<[2], [2], [1], [1], [0, 0, 0, 1, 1, 1], [0], [0]>} : vector<2x8x32xbf16>, vector<2x16x32xbf16>, vector<2x8x16xf32> -> vector<2x8x16xf32>
    "tpu.trace_stop"() : () -> ()
    %cst_35 = arith.constant dense<0xFF800000> : vector<2x8xf32>
    %90 = vector.multi_reduction <maximumf>, %89, %cst_35 [2] : vector<2x8x16xf32> to vector<2x8xf32>
    %91 = vector.shape_cast %90 : vector<2x8xf32> to vector<2x8x1xf32>
    %92 = vector.broadcast %91 : vector<2x8x1xf32> to vector<2x8x16xf32>
    %93 = arith.subf %89, %92 : vector<2x8x16xf32>
    %94 = math.exp %93 : vector<2x8x16xf32>
    %cst_36 = arith.constant dense<0.000000e+00> : vector<2x8xf32>
    %95 = vector.multi_reduction <add>, %94, %cst_36 [2] : vector<2x8x16xf32> to vector<2x8xf32>
    %96 = vector.shape_cast %95 : vector<2x8xf32> to vector<2x8x1xf32>
    %97 = tpu.reciprocal %96 {approx = true} : vector<2x8x1xf32> -> vector<2x8x1xf32>
    %98 = vector.broadcast %97 : vector<2x8x1xf32> to vector<2x8x16xf32>
    %99 = arith.mulf %94, %98 : vector<2x8x16xf32>
    %100 = arith.truncf %99 : vector<2x8x16xf32> to vector<2x8x16xbf16>
    %101 = arith.truncf %86 : vector<2x16x32xf32> to vector<2x16x32xbf16>
    "tpu.trace_start"() <{level = 10 : i32, message = "bls,bsd->bld"}> : () -> ()
    %cst_37 = arith.constant dense<0.000000e+00> : vector<2x8x32xf32>
    %102 = tpu.matmul %100, %101, %cst_37 {dimension_numbers = #tpu.dot_dimension_numbers<[2], [1], [1], [2], [0, 0, 0, 1, 1, 2], [0], [0]>} : vector<2x8x16xbf16>, vector<2x16x32xbf16>, vector<2x8x32xf32> -> vector<2x8x32xf32>
    "tpu.trace_stop"() : () -> ()
    %103 = tpu.concatenate %45, %64, %83, %102 in 2 : vector<2x8x32xf32>, vector<2x8x32xf32>, vector<2x8x32xf32>, vector<2x8x32xf32> -> vector<2x8x128xf32>
    %104 = vector.shape_cast %103 : vector<2x8x128xf32> to vector<16x128xf32>
    %105 = arith.truncf %104 : vector<16x128xf32> to vector<16x128xbf16>
    %c0_38 = arith.constant 0 : index
    %c0_39 = arith.constant 0 : index
    %106 = vector.load %arg5[%c0_38, %c0_39] : memref<128x128xbf16, #tpu.memory_space<vmem>>, vector<128x128xbf16>
    %cst_40 = arith.constant dense<0.000000e+00> : vector<16x128xf32>
    %107 = tpu.matmul %105, %106, %cst_40 {dimension_numbers = #tpu.dot_dimension_numbers<[1], [0], [0], [1], [0, 0, 1, 1], [], []>} : vector<16x128xbf16>, vector<128x128xbf16>, vector<16x128xf32> -> vector<16x128xf32>
    %108 = vector.broadcast %9 : vector<1x128xf32> to vector<16x128xf32>
    %109 = arith.addf %107, %108 : vector<16x128xf32>
    %c0_41 = arith.constant 0 : index
    %c0_42 = arith.constant 0 : index
    %110 = vector.load %arg7[%c0_41, %c0_42] : memref<16x128xf32, #tpu.memory_space<vmem>>, vector<16x128xf32>
    tpu.vector_store %arg7[%c0_41, %c0_42], %109 {strides = array<i32>} : memref<16x128xf32, #tpu.memory_space<vmem>>, vector<16x128xf32>,
    return
  }
  func.func @transform_0(%arg0: i32) -> (i32, i32) {
    %c0_i32 = arith.constant 0 : i32
    %c0_i32_0 = arith.constant 0 : i32
    return %arg0, %c0_i32 : i32, i32
  }
  func.func @transform_1(%arg0: i32) -> (i32, i32) {
    %c0_i32 = arith.constant 0 : i32
    %c0_i32_0 = arith.constant 0 : i32
    return %arg0, %c0_i32 : i32, i32
  }
  func.func @transform_2(%arg0: i32) -> (i32, i32) {
    %c0_i32 = arith.constant 0 : i32
    %c0_i32_0 = arith.constant 0 : i32
    return %arg0, %c0_i32 : i32, i32
  }
  func.func @transform_3(%arg0: i32) -> (i32, i32, i32) {
    %c0_i32 = arith.constant 0 : i32
    %c0_i32_0 = arith.constant 0 : i32
    %c0_i32_1 = arith.constant 0 : i32
    %c0_i32_2 = arith.constant 0 : i32
    return %c0_i32, %c0_i32_0, %c0_i32_1 : i32, i32, i32
  }
  func.func @transform_4(%arg0: i32) -> (i32, i32) {
    %c0_i32 = arith.constant 0 : i32
    %c0_i32_0 = arith.constant 0 : i32
    %c0_i32_1 = arith.constant 0 : i32
    return %c0_i32, %c0_i32_0 : i32, i32
  }
  func.func @transform_5(%arg0: i32) -> (i32, i32) {
    %c0_i32 = arith.constant 0 : i32
    %c0_i32_0 = arith.constant 0 : i32
    %c0_i32_1 = arith.constant 0 : i32
    return %c0_i32, %c0_i32_0 : i32, i32
  }
  func.func @transform_6(%arg0: i32) -> (i32, i32) {
    %c0_i32 = arith.constant 0 : i32
    %c0_i32_0 = arith.constant 0 : i32
    return %arg0, %c0_i32 : i32, i32
  }
}

</mosaic_0001>

<llo_original>
// kernel: tpu_custom_call.1
$region0: #{tpu_custom_call.1}
  #allocation0 [shape = 'u32[]', space=smem, size = 0x4, offset = 0x4, fixed_abs, tag = 'smem constant byte address 0x4 - core index']
  #allocation1 [shape = 'u32[72,128]{1,0:T(1,128)}', space=vmem, size = 0x9000, scoped, tag = 'internal scratch']
  %s0 = inlined_call_operand.hbm [shape: bf16[32,128], index: 0, kind: input, shape index: {}]
  %s1 = inlined_call_operand.hbm [shape: bf16[64,128], index: 1, kind: input, shape index: {}]
  %s2 = inlined_call_operand.hbm [shape: bf16[64,128], index: 2, kind: input, shape index: {}]
  %s3 = inlined_call_operand.hbm [shape: bf16[3,128,128], index: 3, kind: input, shape index: {}]
  %s4 = inlined_call_operand.hbm [shape: bf16[128,128], index: 4, kind: input, shape index: {}]
  %s5 = inlined_call_operand.hbm [shape: f32[8,128], index: 5, kind: input, shape index: {}]
  %s6 = inlined_call_operand.hbm [shape: f32[32,128], index: 6, kind: output, shape index: {}]
  %s7 = sld [smem:[#allocation0]]
  $region81: #{tpu_custom_call.1} parent=0
    _
  %s9 = ssub.s32 1, %s7
  %s10 = scalar_select 0, %s9, %s7
  $region1: #{tpu_custom_call.1} parent=0
    #allocation2 [shape = 'u8[8192]{0}', space=vmem, size = 0x2000, scoped, tag = 'input window, operand 0']
    #allocation3 [shape = 's32[2]{0}', space=sflag, size = 0x8, scoped, tag = 'scoped memory for tpu_custom_call.1']
    #allocation4 [shape = 's32[2]{0}', space=sflag, size = 0x8, scoped, tag = 'scoped memory for tpu_custom_call.1']
    #allocation5 [shape = 'u8[16384]{0}', space=vmem, size = 0x4000, scoped, tag = 'input window, operand 1']
    #allocation6 [shape = 's32[2]{0}', space=sflag, size = 0x8, scoped, tag = 'scoped memory for tpu_custom_call.1']
    #allocation7 [shape = 'u8[16384]{0}', space=vmem, size = 0x4000, scoped, tag = 'input window, operand 2']
    #allocation8 [shape = 'u8[98304]{0}', space=vmem, size = 0x18000, scoped, tag = 'input window, operand 3, single buffered']
    #allocation9 [shape = 's32[1]{0}', space=sflag, size = 0x4, scoped, tag = 'scoped memory for tpu_custom_call.1']
    #allocation10 [shape = 'u8[32768]{0}', space=vmem, size = 0x8000, scoped, tag = 'input window, operand 4, single buffered']
    #allocation11 [shape = 'u8[4096]{0}', space=vmem, size = 0x1000, scoped, tag = 'input window, operand 5, single buffered']
    #allocation12 [shape = 's32[1]{0}', space=sflag, size = 0x4, scoped, tag = 'scoped memory for tpu_custom_call.1']
    #allocation13 [shape = 'u8[16384]{0}', space=vmem, size = 0x4000, scoped, tag = 'output window, operand 0']
    %11 = vsyncpa [#allocation3], 0
    %s12 = scalar_lea.sflag [#allocation3], 1
    %13 = vsyncpa %s12, 0
    %14 = vsyncpa [#allocation6], 0
    %s15 = scalar_lea.sflag [#allocation6], 1
    %16 = vsyncpa %s15, 0
    %17 = vsyncpa [#allocation9], 0
    %18 = vsyncpa [#allocation12], 0
    %19 = vsyncpa [#allocation4], 0
    %s20 = scalar_lea.sflag [#allocation4], 1
    %21 = vsyncpa %s20, 0
    loop: start=0, step=1, limit=4
    $region2: #{tpu_custom_call.1} parent=1 // loop_pre_header
      _
    $region3: #{tpu_custom_call.1} parent=1 // loop_header
      %s23 = sphi 0, %s27
      %p24 = scmp.ge.s32.totalorder %s23, 4
      %s33 = sphi 0, %s35
      %s36 = sphi 0, %s33
      %s37 = sphi 0, %s36
      %s53 = sphi 0, %s37
      %s59 = sphi 0, %s61
      %s62 = sphi 0, %s59
      %s63 = sphi 0, %s62
      %s79 = sphi 0, %s63
      %s85 = sphi 0, %s87
      %s88 = sphi 0, %s85
      %s89 = sphi 0, %s88
      %s105 = sphi 0, %s89
      %s109 = sphi 0, %s109
      %s111 = sphi 0, %s109
      %s112 = sphi 0, %s111
      %s126 = sphi 0, %s112
      %s130 = sphi 0, %s130
      %s132 = sphi 0, %s130
      %s133 = sphi 0, %s132
      %s147 = sphi 0, %s133
      %s151 = sphi 0, %s151
      %s153 = sphi 0, %s151
      %s154 = sphi 0, %s153
      %s168 = sphi 0, %s154
      %s174 = sphi 0, %s176
      %s177 = sphi 0, %s174
      %s178 = sphi 0, %s177
      %s194 = sphi 0, %s178
    $region4: #{tpu_custom_call.1} parent=1 // loop_header_branch
      %26 = sbr.rel (%p24) target = $region8
    $region5: #{tpu_custom_call.1} parent=1 // loop_body
      %s28 = ssub.s32 %s23, 1
      %s29 = ssub.s32 %s23, 2
      %s30 = sadd.s32 %s23, 1
      %s31 = ssub.s32 %s23, %s30
      %p32 = scmp.eq.s32.totalorder %s31, 0
      %s34 = sadd.s32 %s33, 1
      %s35 = scalar_select %p32, %s33, %s34
      %p38 = pneg %p32
      %p39 = scmp.eq.s32.totalorder %s23, 1
      %p40 = por %p38, %p39
      %p41 = scmp.ne.s32.totalorder %s33, %s36
      %p42 = scmp.eq.s32.totalorder %s23, 0
      %p43 = por %p41, %p42
      %p44 = scmp.ne.s32.totalorder %s33, %s36
      %p45 = scmp.eq.s32.totalorder %s28, 1
      %p46 = por %p44, %p45
      %p47 = scmp.ne.s32.totalorder %s36, %s37
      %p48 = scmp.eq.s32.totalorder %s28, 0
      %p49 = por %p47, %p48
      %p50 = scmp.ne.s32.totalorder %s36, %s37
      %p51 = scmp.eq.s32.totalorder %s29, 1
      %p52 = por %p50, %p51
      %p54 = scmp.ne.s32.totalorder %s37, %s53
      %p55 = scmp.eq.s32.totalorder %s29, 0
      %p56 = por %p54, %p55
      %s57 = ssub.s32 %s23, %s30
      %p58 = scmp.eq.s32.totalorder %s57, 0
      %s60 = sadd.s32 %s59, 1
      %s61 = scalar_select %p58, %s59, %s60
      %p64 = pneg %p58
      %p65 = scmp.eq.s32.totalorder %s23, 1
      %p66 = por %p64, %p65
      %p67 = scmp.ne.s32.totalorder %s59, %s62
      %p68 = scmp.eq.s32.totalorder %s23, 0
      %p69 = por %p67, %p68
      %p70 = scmp.ne.s32.totalorder %s59, %s62
      %p71 = scmp.eq.s32.totalorder %s28, 1
      %p72 = por %p70, %p71
      %p73 = scmp.ne.s32.totalorder %s62, %s63
      %p74 = scmp.eq.s32.totalorder %s28, 0
      %p75 = por %p73, %p74
      %p76 = scmp.ne.s32.totalorder %s62, %s63
      %p77 = scmp.eq.s32.totalorder %s29, 1
      %p78 = por %p76, %p77
      %p80 = scmp.ne.s32.totalorder %s63, %s79
      %p81 = scmp.eq.s32.totalorder %s29, 0
      %p82 = por %p80, %p81
      %s83 = ssub.s32 %s23, %s30
      %p84 = scmp.eq.s32.totalorder %s83, 0
      %s86 = sadd.s32 %s85, 1
      %s87 = scalar_select %p84, %s85, %s86
      %p90 = pneg %p84
      %p91 = scmp.eq.s32.totalorder %s23, 1
      %p92 = por %p90, %p91
      %p93 = scmp.ne.s32.totalorder %s85, %s88
      %p94 = scmp.eq.s32.totalorder %s23, 0
      %p95 = por %p93, %p94
      %p96 = scmp.ne.s32.totalorder %s85, %s88
      %p97 = scmp.eq.s32.totalorder %s28, 1
      %p98 = por %p96, %p97
      %p99 = scmp.ne.s32.totalorder %s88, %s89
      %p100 = scmp.eq.s32.totalorder %s28, 0
      %p101 = por %p99, %p100
      %p102 = scmp.ne.s32.totalorder %s88, %s89
      %p103 = scmp.eq.s32.totalorder %s29, 1
      %p104 = por %p102, %p103
      %p106 = scmp.ne.s32.totalorder %s89, %s105
      %p107 = scmp.eq.s32.totalorder %s29, 0
      %p108 = por %p106, %p107
      %s110 = sadd.s32 %s109, 1
      %p113 = scmp.eq.s32.totalorder %s23, 1
      %p114 = scmp.ne.s32.totalorder %s109, %s111
      %p115 = scmp.eq.s32.totalorder %s23, 0
      %p116 = por %p114, %p115
      %p117 = scmp.ne.s32.totalorder %s109, %s111
      %p118 = scmp.eq.s32.totalorder %s28, 1
      %p119 = por %p117, %p118
      %p120 = scmp.ne.s32.totalorder %s111, %s112
      %p121 = scmp.eq.s32.totalorder %s28, 0
      %p122 = por %p120, %p121
      %p123 = scmp.ne.s32.totalorder %s111, %s112
      %p124 = scmp.eq.s32.totalorder %s29, 1
      %p125 = por %p123, %p124
      %p127 = scmp.ne.s32.totalorder %s112, %s126
      %p128 = scmp.eq.s32.totalorder %s29, 0
      %p129 = por %p127, %p128
      %s131 = sadd.s32 %s130, 1
      %p134 = scmp.eq.s32.totalorder %s23, 1
      %p135 = scmp.ne.s32.totalorder %s130, %s132
      %p136 = scmp.eq.s32.totalorder %s23, 0
      %p137 = por %p135, %p136
      %p138 = scmp.ne.s32.totalorder %s130, %s132
      %p139 = scmp.eq.s32.totalorder %s28, 1
      %p140 = por %p138, %p139
      %p141 = scmp.ne.s32.totalorder %s132, %s133
      %p142 = scmp.eq.s32.totalorder %s28, 0
      %p143 = por %p141, %p142
      %p144 = scmp.ne.s32.totalorder %s132, %s133
      %p145 = scmp.eq.s32.totalorder %s29, 1
      %p146 = por %p144, %p145
      %p148 = scmp.ne.s32.totalorder %s133, %s147
      %p149 = scmp.eq.s32.totalorder %s29, 0
      %p150 = por %p148, %p149
      %s152 = sadd.s32 %s151, 1
      %p155 = scmp.eq.s32.totalorder %s23, 1
      %p156 = scmp.ne.s32.totalorder %s151, %s153
      %p157 = scmp.eq.s32.totalorder %s23, 0
      %p158 = por %p156, %p157
      %p159 = scmp.ne.s32.totalorder %s151, %s153
      %p160 = scmp.eq.s32.totalorder %s28, 1
      %p161 = por %p159, %p160
      %p162 = scmp.ne.s32.totalorder %s153, %s154
      %p163 = scmp.eq.s32.totalorder %s28, 0
      %p164 = por %p162, %p163
      %p165 = scmp.ne.s32.totalorder %s153, %s154
      %p166 = scmp.eq.s32.totalorder %s29, 1
      %p167 = por %p165, %p166
      %p169 = scmp.ne.s32.totalorder %s154, %s168
      %p170 = scmp.eq.s32.totalorder %s29, 0
      %p171 = por %p169, %p170
      %s172 = ssub.s32 %s23, %s30
      %p173 = scmp.eq.s32.totalorder %s172, 0
      %s175 = sadd.s32 %s174, 1
      %s176 = scalar_select %p173, %s174, %s175
      %p179 = pneg %p173
      %p180 = scmp.eq.s32.totalorder %s23, 1
      %p181 = por %p179, %p180
      %p182 = scmp.ne.s32.totalorder %s174, %s177
      %p183 = scmp.eq.s32.totalorder %s23, 0
      %p184 = por %p182, %p183
      %p185 = scmp.ne.s32.totalorder %s174, %s177
      %p186 = scmp.eq.s32.totalorder %s28, 1
      %p187 = por %p185, %p186
      %p188 = scmp.ne.s32.totalorder %s177, %s178
      %p189 = scmp.eq.s32.totalorder %s28, 0
      %p190 = por %p188, %p189
      %p191 = scmp.ne.s32.totalorder %s177, %s178
      %p192 = scmp.eq.s32.totalorder %s29, 1
      %p193 = por %p191, %p192
      %p195 = scmp.ne.s32.totalorder %s178, %s194
      %p196 = scmp.eq.s32.totalorder %s29, 0
      %p197 = por %p195, %p196
      %p198 = scmp.le.s32.totalorder 1, %s23
      %p199 = scmp.lt.s32.totalorder %s23, 3
      %p200 = pnand %p198, %p199
      %p201 = pneg %p200
      // Predicated region
      $region9: #{tpu_custom_call.1} parent=5 // pred_check
        _
      $region10: #{tpu_custom_call.1} parent=5 // pred_check_branch
        %203 = sbr.rel (%p200) target = $region12
      $region11: #{tpu_custom_call.1} parent=5 // pred_region
        %s204 = ssub.s32 %s23, 1
        // Predicated region
        $region13: #{tpu_custom_call.1} parent=11 // pred_check
          %p205 = pneg %p122
        $region14: #{tpu_custom_call.1} parent=11 // pred_check_branch
          %207 = sbr.rel (%p205) target = $region16
        $region15: #{tpu_custom_call.1} parent=11 // pred_region
          %209 = vsyncadd [#allocation9], 0
          %s210 = sshll.u32 %s3, 4
          %s211 = int_to_ptr.hbm [resolvable:$true] %s210
          %s212 = sshll.u32 [#allocation8], 4
          %s213 = int_to_ptr.vmem [resolvable:$true] %s212
          %218 = dma.hbm_to_vmem [thread:$0]  %s211, 3072, %s213, [#allocation9], 64, 64, 4
        $region16: #{tpu_custom_call.1} parent=11 // pred_fallthru
          _
        // Predicated region
        $region17: #{tpu_custom_call.1} parent=11 // pred_check
          %p219 = pneg %p143
        $region18: #{tpu_custom_call.1} parent=11 // pred_check_branch
          %221 = sbr.rel (%p219) target = $region20
        $region19: #{tpu_custom_call.1} parent=11 // pred_region
          %223 = vsyncadd [#allocation9], 0
          %s224 = sshll.u32 %s4, 4
          %s225 = int_to_ptr.hbm [resolvable:$true] %s224
          %s226 = sshll.u32 [#allocation10], 4
          %s227 = int_to_ptr.vmem [resolvable:$true] %s226
          %232 = dma.hbm_to_vmem [thread:$0]  %s225, 1024, %s227, [#allocation9], 64, 64, 4
        $region20: #{tpu_custom_call.1} parent=11 // pred_fallthru
          _
        // Predicated region
        $region21: #{tpu_custom_call.1} parent=11 // pred_check
          %p233 = pneg %p164
        $region22: #{tpu_custom_call.1} parent=11 // pred_check_branch
          %235 = sbr.rel (%p233) target = $region24
        $region23: #{tpu_custom_call.1} parent=11 // pred_region
          %237 = vsyncadd [#allocation12], 0
          %s239 = sshll.u32 %s5, 4
          %s240 = int_to_ptr.hbm [resolvable:$true] %s239
          %s241 = sshll.u32 [#allocation11], 4
          %s242 = int_to_ptr.vmem [resolvable:$true] %s241
          %244 = dma.hbm_to_vmem [thread:$0]  %s240, 128, %s242, [#allocation12]
        $region24: #{tpu_custom_call.1} parent=11 // pred_fallthru
          _
      $region12: #{tpu_custom_call.1} parent=5 // pred_fallthru
        _
      %p245 = scmp.lt.s32.totalorder %s23, 2
      // Predicated region
      $region25: #{tpu_custom_call.1} parent=5 // pred_check
        %p246 = pneg %p245
      $region26: #{tpu_custom_call.1} parent=5 // pred_check_branch
        %248 = sbr.rel (%p246) target = $region28
      $region27: #{tpu_custom_call.1} parent=5 // pred_region
        // Predicated region
        $region29: #{tpu_custom_call.1} parent=27 // pred_check
          %p249 = pneg %p43
        $region30: #{tpu_custom_call.1} parent=27 // pred_check_branch
          %251 = sbr.rel (%p249) target = $region32
        $region31: #{tpu_custom_call.1} parent=27 // pred_region
          %s252 = sand.u32 %s33, 1
          %s253 = scalar_lea.sflag [#allocation3], %s252
          %s254 = sand.u32 %s33, 1
          %s255 = smul.addr %s254, 8
          %s256 = scalar_lea.vmem [#allocation2], %s255
          %s257 = smul.u32 2, %s23
          %259 = vsyncadd %s253, 0
          %s260 = smul.addr %s257, 4
          %s261 = scalar_lea.hbm %s0, %s260
          %s262 = sshll.u32 %s261, 4
          %s263 = int_to_ptr.hbm [resolvable:$true] %s262
          %s264 = sshll.u32 %s256, 4
          %s265 = int_to_ptr.vmem [resolvable:$true] %s264
          %270 = dma.hbm_to_vmem [thread:$0]  %s263, 128, %s265, %s253, 64, 64, 4
        $region32: #{tpu_custom_call.1} parent=27 // pred_fallthru
          _
        // Predicated region
        $region33: #{tpu_custom_call.1} parent=27 // pred_check
          %p271 = pneg %p69
        $region34: #{tpu_custom_call.1} parent=27 // pred_check_branch
          %273 = sbr.rel (%p271) target = $region36
        $region35: #{tpu_custom_call.1} parent=27 // pred_region
          %s274 = sand.u32 %s23, 1
          %s275 = scalar_lea.sflag [#allocation6], %s274
          %s276 = sand.u32 %s59, 1
          %s277 = smul.addr %s276, 16
          %s278 = scalar_lea.vmem [#allocation5], %s277
          %s279 = smul.u32 4, %s23
          %281 = vsyncadd %s275, 0
          %s282 = smul.addr %s279, 4
          %s283 = scalar_lea.hbm %s1, %s282
          %s284 = sshll.u32 %s283, 4
          %s285 = int_to_ptr.hbm [resolvable:$true] %s284
          %s286 = sshll.u32 %s278, 4
          %s287 = int_to_ptr.vmem [resolvable:$true] %s286
          %292 = dma.hbm_to_vmem [thread:$0]  %s285, 256, %s287, %s275, 64, 64, 4
        $region36: #{tpu_custom_call.1} parent=27 // pred_fallthru
          _
        // Predicated region
        $region37: #{tpu_custom_call.1} parent=27 // pred_check
          %p293 = pneg %p95
        $region38: #{tpu_custom_call.1} parent=27 // pred_check_branch
          %295 = sbr.rel (%p293) target = $region40
        $region39: #{tpu_custom_call.1} parent=27 // pred_region
          %s296 = sand.u32 %s23, 1
          %s297 = scalar_lea.sflag [#allocation6], %s296
          %s298 = sand.u32 %s85, 1
          %s299 = smul.addr %s298, 16
          %s300 = scalar_lea.vmem [#allocation7], %s299
          %s301 = smul.u32 4, %s23
          %303 = vsyncadd %s297, 0
          %s304 = smul.addr %s301, 4
          %s305 = scalar_lea.hbm %s2, %s304
          %s306 = sshll.u32 %s305, 4
          %s307 = int_to_ptr.hbm [resolvable:$true] %s306
          %s308 = sshll.u32 %s300, 4
          %s309 = int_to_ptr.vmem [resolvable:$true] %s308
          %314 = dma.hbm_to_vmem [thread:$0]  %s307, 256, %s309, %s297, 64, 64, 4
        $region40: #{tpu_custom_call.1} parent=27 // pred_fallthru
          _
      $region28: #{tpu_custom_call.1} parent=5 // pred_fallthru
        _
      %p315 = scmp.le.s32.totalorder 1, %s23
      %p316 = scmp.lt.s32.totalorder %s23, 3
      %p317 = pnand %p315, %p316
      %p318 = pneg %p317
      // Predicated region
      $region41: #{tpu_custom_call.1} parent=5 // pred_check
        _
      $region42: #{tpu_custom_call.1} parent=5 // pred_check_branch
        %320 = sbr.rel (%p317) target = $region44
      $region43: #{tpu_custom_call.1} parent=5 // pred_region
        %s321 = ssub.s32 %s23, 1
        %s322 = sand.u32 %s36, 1
        %s323 = scalar_lea.sflag [#allocation3], %s322
        %s324 = sand.u32 %s36, 1
        %s325 = smul.addr %s324, 8
        %s326 = scalar_lea.vmem [#allocation2], %s325
        // Predicated region
        $region45: #{tpu_custom_call.1} parent=43 // pred_check
          %p327 = pneg %p49
        $region46: #{tpu_custom_call.1} parent=43 // pred_check_branch
          %329 = sbr.rel (%p327) target = $region48
        $region47: #{tpu_custom_call.1} parent=43 // pred_region
          %331 = dma.done %s323, 128
        $region48: #{tpu_custom_call.1} parent=43 // pred_fallthru
          _
        %s332 = sand.u32 %s28, 1
        %s333 = scalar_lea.sflag [#allocation6], %s332
        %s334 = sand.u32 %s62, 1
        %s335 = smul.addr %s334, 16
        %s336 = scalar_lea.vmem [#allocation5], %s335
        // Predicated region
        $region49: #{tpu_custom_call.1} parent=43 // pred_check
          %p337 = pneg %p75
        $region50: #{tpu_custom_call.1} parent=43 // pred_check_branch
          %339 = sbr.rel (%p337) target = $region52
        $region51: #{tpu_custom_call.1} parent=43 // pred_region
          %341 = dma.done %s333, 256
        $region52: #{tpu_custom_call.1} parent=43 // pred_fallthru
          _
        %s342 = sand.u32 %s28, 1
        %s343 = scalar_lea.sflag [#allocation6], %s342
        %s344 = sand.u32 %s88, 1
        %s345 = smul.addr %s344, 16
        %s346 = scalar_lea.vmem [#allocation7], %s345
        // Predicated region
        $region53: #{tpu_custom_call.1} parent=43 // pred_check
          %p347 = pneg %p101
        $region54: #{tpu_custom_call.1} parent=43 // pred_check_branch
          %349 = sbr.rel (%p347) target = $region56
        $region55: #{tpu_custom_call.1} parent=43 // pred_region
          %351 = dma.done %s343, 256
        $region56: #{tpu_custom_call.1} parent=43 // pred_fallthru
          _
        // Predicated region
        $region57: #{tpu_custom_call.1} parent=43 // pred_check
          %p352 = pneg %p122
        $region58: #{tpu_custom_call.1} parent=43 // pred_check_branch
          %354 = sbr.rel (%p352) target = $region60
        $region59: #{tpu_custom_call.1} parent=43 // pred_region
          %356 = dma.done [#allocation9], 3072
        $region60: #{tpu_custom_call.1} parent=43 // pred_fallthru
          _
        // Predicated region
        $region61: #{tpu_custom_call.1} parent=43 // pred_check
          %p357 = pneg %p143
        $region62: #{tpu_custom_call.1} parent=43 // pred_check_branch
          %359 = sbr.rel (%p357) target = $region64
        $region63: #{tpu_custom_call.1} parent=43 // pred_region
          %361 = dma.done [#allocation9], 1024
        $region64: #{tpu_custom_call.1} parent=43 // pred_fallthru
          _
        // Predicated region
        $region65: #{tpu_custom_call.1} parent=43 // pred_check
          %p362 = pneg %p164
        $region66: #{tpu_custom_call.1} parent=43 // pred_check_branch
          %364 = sbr.rel (%p362) target = $region68
        $region67: #{tpu_custom_call.1} parent=43 // pred_region
          %366 = dma.done [#allocation12], 128
        $region68: #{tpu_custom_call.1} parent=43 // pred_fallthru
          _
        %s367 = sand.u32 %s36, 1
        %s368 = scalar_lea.sflag [#allocation3], %s367
        %s369 = sand.u32 %s36, 1
        %s370 = smul.addr %s369, 8
        %s371 = scalar_lea.vmem [#allocation2], %s370
        %p372 = pneg %p49
        %p373 = pneg %p46
        %s374 = sand.u32 %s28, 1
        %s375 = scalar_lea.sflag [#allocation6], %s374
        %s376 = sand.u32 %s62, 1
        %s377 = smul.addr %s376, 16
        %s378 = scalar_lea.vmem [#allocation5], %s377
        %p379 = pneg %p75
        %p380 = pneg %p72
        %s381 = sand.u32 %s28, 1
        %s382 = scalar_lea.sflag [#allocation6], %s381
        %s383 = sand.u32 %s88, 1
        %s384 = smul.addr %s383, 16
        %s385 = scalar_lea.vmem [#allocation7], %s384
        %p386 = pneg %p101
        %p387 = pneg %p98
        %p388 = pneg %p122
        %p389 = pneg %p119
        %p390 = pneg %p143
        %p391 = pneg %p140
        %p392 = pneg %p164
        %p393 = pneg %p161
        %p394 = pneg %p190
        %p395 = pneg %p187
        %s396 = sand.u32 %s177, 1
        %s397 = scalar_lea.sflag [#allocation4], %s396
        %s398 = sand.u32 %s177, 1
        %s399 = smul.addr %s398, 16
        %s400 = scalar_lea.vmem [#allocation13], %s399
        %s401 = smul.u32 2, %s28
        %s402 = smul.u32 4, %s28
        %s403 = smul.u32 4, %s28
        %s404 = smul.u32 2, %s28
        %v406 = vld [vmem:[#allocation8] sm:$0xf]
        %v407 = vld [vmem:[#allocation8 + $0x4] sm:$0xf]
        %v408 = vld [vmem:[#allocation8 + $0x8] sm:$0xf]
        %v409 = vld [vmem:[#allocation8 + $0xc] sm:$0xf]
        %v410 = vld [vmem:[#allocation8 + $0x10] sm:$0xf]
        %v411 = vld [vmem:[#allocation8 + $0x14] sm:$0xf]
        %v412 = vld [vmem:[#allocation8 + $0x18] sm:$0xf]
        %v413 = vld [vmem:[#allocation8 + $0x1c] sm:$0xf]
        %v414 = vld [vmem:[#allocation8 + $0x20] sm:$0xf]
        %v415 = vld [vmem:[#allocation8 + $0x24] sm:$0xf]
        %v416 = vld [vmem:[#allocation8 + $0x28] sm:$0xf]
        %v417 = vld [vmem:[#allocation8 + $0x2c] sm:$0xf]
        %v418 = vld [vmem:[#allocation8 + $0x30] sm:$0xf]
        %v419 = vld [vmem:[#allocation8 + $0x34] sm:$0xf]
        %v420 = vld [vmem:[#allocation8 + $0x38] sm:$0xf]
        %v421 = vld [vmem:[#allocation8 + $0x3c] sm:$0xf]
        %s422 = scalar_lea.vmem [#allocation8], 64
        %v423 = vld [vmem:[%s422] sm:$0xf]
        %v424 = vld [vmem:[%s422 + $0x4] sm:$0xf]
        %v425 = vld [vmem:[%s422 + $0x8] sm:$0xf]
        %v426 = vld [vmem:[%s422 + $0xc] sm:$0xf]
        %v427 = vld [vmem:[%s422 + $0x10] sm:$0xf]
        %v428 = vld [vmem:[%s422 + $0x14] sm:$0xf]
        %v429 = vld [vmem:[%s422 + $0x18] sm:$0xf]
        %v430 = vld [vmem:[%s422 + $0x1c] sm:$0xf]
        %v431 = vld [vmem:[%s422 + $0x20] sm:$0xf]
        %v432 = vld [vmem:[%s422 + $0x24] sm:$0xf]
        %v433 = vld [vmem:[%s422 + $0x28] sm:$0xf]
        %v434 = vld [vmem:[%s422 + $0x2c] sm:$0xf]
        %v435 = vld [vmem:[%s422 + $0x30] sm:$0xf]
        %v436 = vld [vmem:[%s422 + $0x34] sm:$0xf]
        %v437 = vld [vmem:[%s422 + $0x38] sm:$0xf]
        %v438 = vld [vmem:[%s422 + $0x3c] sm:$0xf]
        %s439 = scalar_lea.vmem [#allocation8], 128
        %v440 = vld [vmem:[%s439] sm:$0xf]
        %v441 = vld [vmem:[%s439 + $0x4] sm:$0xf]
        %v442 = vld [vmem:[%s439 + $0x8] sm:$0xf]
        %v443 = vld [vmem:[%s439 + $0xc] sm:$0xf]
        %v444 = vld [vmem:[%s439 + $0x10] sm:$0xf]
        %v445 = vld [vmem:[%s439 + $0x14] sm:$0xf]
        %v446 = vld [vmem:[%s439 + $0x18] sm:$0xf]
        %v447 = vld [vmem:[%s439 + $0x1c] sm:$0xf]
        %v448 = vld [vmem:[%s439 + $0x20] sm:$0xf]
        %v449 = vld [vmem:[%s439 + $0x24] sm:$0xf]
        %v450 = vld [vmem:[%s439 + $0x28] sm:$0xf]
        %v451 = vld [vmem:[%s439 + $0x2c] sm:$0xf]
        %v452 = vld [vmem:[%s439 + $0x30] sm:$0xf]
        %v453 = vld [vmem:[%s439 + $0x34] sm:$0xf]
        %v454 = vld [vmem:[%s439 + $0x38] sm:$0xf]
        %v455 = vld [vmem:[%s439 + $0x3c] sm:$0xf]
        %v456 = vld [vmem:[#allocation11] sm:$0x1]
        %v457 = vld [vmem:[#allocation11 + $0x1] sm:$0x1]
        %v458 = vld [vmem:[#allocation11 + $0x2] sm:$0x1]
        %v459 = vld [vmem:[#allocation11 + $0x3] sm:$0x1]
        %v460 = vld [vmem:[%s326] sm:$0xf]
        %v461 = vld [vmem:[%s326 + $0x4] sm:$0xf]
        %v462 = vperm.slane %v456, 0
        %v465 = vunpack.c.l.b16 %v460
        %v466 = vunpack.c.l.b16 %v461
        %v467 = vpack.c.b16 %v466, %v465
        %v485 = vunpack.c.l.b16 %v406
        %v486 = vunpack.c.l.b16 %v407
        %v487 = vunpack.c.l.b16 %v408
        %v488 = vunpack.c.l.b16 %v409
        %v489 = vunpack.c.l.b16 %v410
        %v490 = vunpack.c.l.b16 %v411
        %v491 = vunpack.c.l.b16 %v412
        %v492 = vunpack.c.l.b16 %v413
        %v493 = vunpack.c.l.b16 %v414
        %v494 = vunpack.c.l.b16 %v415
        %v495 = vunpack.c.l.b16 %v416
        %v496 = vunpack.c.l.b16 %v417
        %v497 = vunpack.c.l.b16 %v418
        %v498 = vunpack.c.l.b16 %v419
        %v499 = vunpack.c.l.b16 %v420
        %v500 = vunpack.c.l.b16 %v421
        %v501 = vpack.c.b16 %v486, %v485
        %v502 = vpack.c.b16 %v488, %v487
        %v503 = vpack.c.b16 %v490, %v489
        %v504 = vpack.c.b16 %v492, %v491
        %v505 = vpack.c.b16 %v494, %v493
        %v506 = vpack.c.b16 %v496, %v495
        %v507 = vpack.c.b16 %v498, %v497
        %v508 = vpack.c.b16 %v500, %v499
        %517 = vmatpush.bf16.msra.mxu0 %v508
        %518 = vmatpush.bf16.msra.mxu0 %v507
        %519 = vmatpush.bf16.msra.mxu0 %v506
        %520 = vmatpush.bf16.msra.mxu0 %v505
        %521 = vmatpush.bf16.msra.mxu0 %v504
        %522 = vmatpush.bf16.msra.mxu0 %v503
        %523 = vmatpush.bf16.msra.mxu0 %v502
        %524 = vmatpush.bf16.msra.mxu0 %v501
        %525 = vmatmul.bf16.gmra.mxu0 %v467
        %v526 = vpop.f32.mrf.mxu0
        %v527 = vadd.f32 %v462, %v526
        %v528 = vpop.f32.mrf.mxu0
        %v529 = vadd.f32 %v462, %v528
        %530 = vdwg.mxu0
        %v531 = vld [vmem:[%s336] sm:$0xf]
        %v532 = vld [vmem:[%s336 + $0x4] sm:$0xf]
        %v533 = vld [vmem:[%s336 + $0x8] sm:$0xf]
        %v534 = vld [vmem:[%s336 + $0xc] sm:$0xf]
        %v535 = vperm.slane %v457, 0
        %v540 = vunpack.c.l.b16 %v531
        %v541 = vunpack.c.l.b16 %v532
        %v542 = vunpack.c.l.b16 %v533
        %v543 = vunpack.c.l.b16 %v534
        %v544 = vpack.c.b16 %v541, %v540
        %v545 = vpack.c.b16 %v543, %v542
        %v564 = vunpack.c.l.b16 %v423
        %v565 = vunpack.c.l.b16 %v424
        %v566 = vunpack.c.l.b16 %v425
        %v567 = vunpack.c.l.b16 %v426
        %v568 = vunpack.c.l.b16 %v427
        %v569 = vunpack.c.l.b16 %v428
        %v570 = vunpack.c.l.b16 %v429
        %v571 = vunpack.c.l.b16 %v430
        %v572 = vunpack.c.l.b16 %v431
        %v573 = vunpack.c.l.b16 %v432
        %v574 = vunpack.c.l.b16 %v433
        %v575 = vunpack.c.l.b16 %v434
        %v576 = vunpack.c.l.b16 %v435
        %v577 = vunpack.c.l.b16 %v436
        %v578 = vunpack.c.l.b16 %v437
        %v579 = vunpack.c.l.b16 %v438
        %v580 = vpack.c.b16 %v565, %v564
        %v581 = vpack.c.b16 %v567, %v566
        %v582 = vpack.c.b16 %v569, %v568
        %v583 = vpack.c.b16 %v571, %v570
        %v584 = vpack.c.b16 %v573, %v572
        %v585 = vpack.c.b16 %v575, %v574
        %v586 = vpack.c.b16 %v577, %v576
        %v587 = vpack.c.b16 %v579, %v578
        %596 = vmatpush.bf16.msra.mxu0 %v587
        %597 = vmatpush.bf16.msra.mxu0 %v586
        %598 = vmatpush.bf16.msra.mxu0 %v585
        %599 = vmatpush.bf16.msra.mxu0 %v584
        %600 = vmatpush.bf16.msra.mxu0 %v583
        %601 = vmatpush.bf16.msra.mxu0 %v582
        %602 = vmatpush.bf16.msra.mxu0 %v581
        %603 = vmatpush.bf16.msra.mxu0 %v580
        %604 = vmatmul.bf16.gmra.mxu0 %v544
        %v605 = vpop.f32.mrf.mxu0
        %v606 = vadd.f32 %v535, %v605
        %v607 = vpop.f32.mrf.mxu0
        %v608 = vadd.f32 %v535, %v607
        %609 = vmatmul.bf16.gmra.mxu0 %v545
        %v610 = vpop.f32.mrf.mxu0
        %v611 = vadd.f32 %v535, %v610
        %v612 = vpop.f32.mrf.mxu0
        %v613 = vadd.f32 %v535, %v612
        %614 = vdwg.mxu0
        %v615 = vld [vmem:[%s346] sm:$0xf]
        %v616 = vld [vmem:[%s346 + $0x4] sm:$0xf]
        %v617 = vld [vmem:[%s346 + $0x8] sm:$0xf]
        %v618 = vld [vmem:[%s346 + $0xc] sm:$0xf]
        %v619 = vperm.slane %v458, 0
        %v624 = vunpack.c.l.b16 %v615
        %v625 = vunpack.c.l.b16 %v616
        %v626 = vunpack.c.l.b16 %v617
        %v627 = vunpack.c.l.b16 %v618
        %v628 = vpack.c.b16 %v625, %v624
        %v629 = vpack.c.b16 %v627, %v626
        %v648 = vunpack.c.l.b16 %v440
        %v649 = vunpack.c.l.b16 %v441
        %v650 = vunpack.c.l.b16 %v442
        %v651 = vunpack.c.l.b16 %v443
        %v652 = vunpack.c.l.b16 %v444
        %v653 = vunpack.c.l.b16 %v445
        %v654 = vunpack.c.l.b16 %v446
        %v655 = vunpack.c.l.b16 %v447
        %v656 = vunpack.c.l.b16 %v448
        %v657 = vunpack.c.l.b16 %v449
        %v658 = vunpack.c.l.b16 %v450
        %v659 = vunpack.c.l.b16 %v451
        %v660 = vunpack.c.l.b16 %v452
        %v661 = vunpack.c.l.b16 %v453
        %v662 = vunpack.c.l.b16 %v454
        %v663 = vunpack.c.l.b16 %v455
        %v664 = vpack.c.b16 %v649, %v648
        %v665 = vpack.c.b16 %v651, %v650
        %v666 = vpack.c.b16 %v653, %v652
        %v667 = vpack.c.b16 %v655, %v654
        %v668 = vpack.c.b16 %v657, %v656
        %v669 = vpack.c.b16 %v659, %v658
        %v670 = vpack.c.b16 %v661, %v660
        %v671 = vpack.c.b16 %v663, %v662
        %680 = vmatpush.bf16.msra.mxu0 %v671
        %681 = vmatpush.bf16.msra.mxu0 %v670
        %682 = vmatpush.bf16.msra.mxu0 %v669
        %683 = vmatpush.bf16.msra.mxu0 %v668
        %684 = vmatpush.bf16.msra.mxu0 %v667
        %685 = vmatpush.bf16.msra.mxu0 %v666
        %686 = vmatpush.bf16.msra.mxu0 %v665
        %687 = vmatpush.bf16.msra.mxu0 %v664
        %688 = vmatmul.bf16.gmra.mxu0 %v628
        %v689 = vpop.f32.mrf.mxu0
        %v690 = vadd.f32 %v619, %v689
        %v691 = vpop.f32.mrf.mxu0
        %v692 = vadd.f32 %v619, %v691
        %693 = vmatmul.bf16.gmra.mxu0 %v629
        %v694 = vpop.f32.mrf.mxu0
        %v695 = vadd.f32 %v619, %v694
        %v696 = vpop.f32.mrf.mxu0
        %v697 = vadd.f32 %v619, %v696
        %698 = vdwg.mxu0
        %v699 = vmul.f32 %v527, 0.17677669
        %v700 = vmul.f32 %v529, 0.17677669
        %v701 = vpack.c.bf16 %v699, %v699
        %v702 = vpack.c.bf16 %v700, %v700
        %v703 = vpack.c.bf16 %v606, %v606
        %v704 = vpack.c.bf16 %v608, %v608
        %v705 = vpack.c.bf16 %v611, %v611
        %v706 = vpack.c.bf16 %v613, %v613
        %v709 = vunpack.c.l.b16 %v703
        %v710 = vunpack.c.l.b16 %v704
        %v711 = vpack.c.b16 %v710, %v709
        %vm712 = vcmask 261120
        %v714 = vsel %vm712, %v701, 0
        %v717 = vsel %vm712, %v711, 0
        %719 = vmatpush.bf16.xpose.msra.mxu0 0
        %720 = vmatpush.bf16.xpose.msra.mxu0 0
        %721 = vmatpush.bf16.xpose.msra.mxu0 0
        %722 = vmatpush.bf16.xpose.msra.mxu0 0
        %723 = vmatpush.bf16.xpose.msra.mxu0 0
        %724 = vmatpush.bf16.xpose.msra.mxu0 0
        %725 = vmatpush.bf16.xpose.msra.mxu0 0
        %726 = vmatpush.bf16.xpose.msra.mxu0 %v717
        %727 = vmatmul.bf16.gmra.mxu0 %v714
        %v728 = vpop.f32.mrf.mxu0
        %v729 = vadd.f32 0.0, %v728
        %v730 = vpop.f32.mrf.mxu0
        %731 = vdwg.mxu0
        %v734 = vunpack.c.l.b16 %v705
        %v735 = vunpack.c.l.b16 %v706
        %v736 = vpack.c.b16 %v735, %v734
        %v738 = vsel %vm712, %v702, 0
        %v741 = vsel %vm712, %v736, 0
        %743 = vmatpush.bf16.xpose.msra.mxu0 0
        %744 = vmatpush.bf16.xpose.msra.mxu0 0
        %745 = vmatpush.bf16.xpose.msra.mxu0 0
        %746 = vmatpush.bf16.xpose.msra.mxu0 0
        %747 = vmatpush.bf16.xpose.msra.mxu0 0
        %748 = vmatpush.bf16.xpose.msra.mxu0 0
        %749 = vmatpush.bf16.xpose.msra.mxu0 0
        %750 = vmatpush.bf16.xpose.msra.mxu0 %v741
        %751 = vmatmul.bf16.gmra.mxu0 %v738
        %v752 = vpop.f32.mrf.mxu0
        %v753 = vadd.f32 0.0, %v752
        %v754 = vpop.f32.mrf.mxu0
        %755 = vdwg.mxu0
        %vm756 = vcmask 130048
        %v757 = vsel %vm756, %v729, -inf
        %758 = vmax.xlane.f32.xlu0 %v757
        %v759 = vpop.xlane.xlu0 %758
        %v760 = vsel %vm756, %v753, -inf
        %761 = vmax.xlane.f32.xlu0 %v760
        %v762 = vpop.xlane.xlu0 %761
        %v763 = vsub.f32 %v729, %v759
        %v764 = vsub.f32 %v753, %v762
        %v765 = vmul.f32 %v763, 1.442695
        %v766 = vpow.pop %v765
        %v767 = vmul.f32 %v764, 1.442695
        %v768 = vpow.pop %v767
        %v769 = vsel %vm756, %v766, 0.0
        %770 = vadd.xlane.f32.xlu0 %v769
        %v771 = vpop.xlane.xlu0 %770
        %v772 = vsel %vm756, %v768, 0.0
        %773 = vadd.xlane.f32.xlu0 %v772
        %v774 = vpop.xlane.xlu0 %773
        %v775 = vrcp.pop %v771
        %v776 = vrcp.pop %v774
        %v777 = vmul.f32 %v766, %v775
        %v778 = vmul.f32 %v768, %v776
        %v779 = vpack.c.bf16 %v777, %v777
        %v780 = vpack.c.bf16 %v778, %v778
        %v781 = vpack.c.bf16 %v690, %v690
        %v782 = vpack.c.bf16 %v692, %v692
        %v783 = vpack.c.bf16 %v695, %v695
        %v784 = vpack.c.bf16 %v697, %v697
        %v787 = vunpack.c.l.b16 %v781
        %v788 = vunpack.c.l.b16 %v782
        %v789 = vpack.c.b16 %v788, %v787
        %v792 = vsel %vm756, %v779, 0
        %794 = vmatpush.bf16.msra.mxu0 0
        %795 = vmatpush.bf16.msra.mxu0 0
        %796 = vmatpush.bf16.msra.mxu0 0
        %797 = vmatpush.bf16.msra.mxu0 0
        %798 = vmatpush.bf16.msra.mxu0 0
        %799 = vmatpush.bf16.msra.mxu0 0
        %800 = vmatpush.bf16.msra.mxu0 0
        %801 = vmatpush.bf16.msra.mxu0 %v789
        %802 = vmatmul.bf16.gmra.mxu0 %v792
        %v803 = vpop.f32.mrf.mxu0
        %v804 = vadd.f32 0.0, %v803
        %v805 = vpop.f32.mrf.mxu0
        %806 = vdwg.mxu0
        %v809 = vunpack.c.l.b16 %v783
        %v810 = vunpack.c.l.b16 %v784
        %v811 = vpack.c.b16 %v810, %v809
        %v814 = vsel %vm756, %v780, 0
        %816 = vmatpush.bf16.msra.mxu0 0
        %817 = vmatpush.bf16.msra.mxu0 0
        %818 = vmatpush.bf16.msra.mxu0 0
        %819 = vmatpush.bf16.msra.mxu0 0
        %820 = vmatpush.bf16.msra.mxu0 0
        %821 = vmatpush.bf16.msra.mxu0 0
        %822 = vmatpush.bf16.msra.mxu0 0
        %823 = vmatpush.bf16.msra.mxu0 %v811
        %824 = vmatmul.bf16.gmra.mxu0 %v814
        %v825 = vpop.f32.mrf.mxu0
        %v826 = vadd.f32 0.0, %v825
        %v827 = vpop.f32.mrf.mxu0
        %828 = vdwg.mxu0
        %v830 = vunpack.c.l.b16 %v701
        %v831 = vpack.c.b16 %v830, %v830
        %832 = vrot.lane.b32.xlu0 %v831, 96
        %v833 = vpop.permute.xlu0 %832
        %834 = vrot.lane.b32.xlu0 %v711, 96
        %v835 = vpop.permute.xlu0 %834
        %v837 = vsel %vm712, %v833, 0
        %v840 = vsel %vm712, %v835, 0
        %842 = vmatpush.bf16.xpose.msra.mxu0 0
        %843 = vmatpush.bf16.xpose.msra.mxu0 0
        %844 = vmatpush.bf16.xpose.msra.mxu0 0
        %845 = vmatpush.bf16.xpose.msra.mxu0 0
        %846 = vmatpush.bf16.xpose.msra.mxu0 0
        %847 = vmatpush.bf16.xpose.msra.mxu0 0
        %848 = vmatpush.bf16.xpose.msra.mxu0 0
        %849 = vmatpush.bf16.xpose.msra.mxu0 %v840
        %850 = vmatmul.bf16.gmra.mxu0 %v837
        %v851 = vpop.f32.mrf.mxu0
        %v852 = vadd.f32 0.0, %v851
        %v853 = vpop.f32.mrf.mxu0
        %854 = vdwg.mxu0
        %v856 = vunpack.c.l.b16 %v702
        %v857 = vpack.c.b16 %v856, %v856
        %858 = vrot.lane.b32.xlu0 %v857, 96
        %v859 = vpop.permute.xlu0 %858
        %860 = vrot.lane.b32.xlu0 %v736, 96
        %v861 = vpop.permute.xlu0 %860
        %v863 = vsel %vm712, %v859, 0
        %v866 = vsel %vm712, %v861, 0
        %868 = vmatpush.bf16.xpose.msra.mxu0 0
        %869 = vmatpush.bf16.xpose.msra.mxu0 0
        %870 = vmatpush.bf16.xpose.msra.mxu0 0
        %871 = vmatpush.bf16.xpose.msra.mxu0 0
        %872 = vmatpush.bf16.xpose.msra.mxu0 0
        %873 = vmatpush.bf16.xpose.msra.mxu0 0
        %874 = vmatpush.bf16.xpose.msra.mxu0 0
        %875 = vmatpush.bf16.xpose.msra.mxu0 %v866
        %876 = vmatmul.bf16.gmra.mxu0 %v863
        %v877 = vpop.f32.mrf.mxu0
        %v878 = vadd.f32 0.0, %v877
        %v879 = vpop.f32.mrf.mxu0
        %880 = vdwg.mxu0
        %v881 = vsel %vm756, %v852, -inf
        %882 = vmax.xlane.f32.xlu0 %v881
        %v883 = vpop.xlane.xlu0 %882
        %v884 = vsel %vm756, %v878, -inf
        %885 = vmax.xlane.f32.xlu0 %v884
        %v886 = vpop.xlane.xlu0 %885
        %v887 = vsub.f32 %v852, %v883
        %v888 = vsub.f32 %v878, %v886
        %v889 = vmul.f32 %v887, 1.442695
        %v890 = vpow.pop %v889
        %v891 = vmul.f32 %v888, 1.442695
        %v892 = vpow.pop %v891
        %v893 = vsel %vm756, %v890, 0.0
        %894 = vadd.xlane.f32.xlu0 %v893
        %v895 = vpop.xlane.xlu0 %894
        %v896 = vsel %vm756, %v892, 0.0
        %897 = vadd.xlane.f32.xlu0 %v896
        %v898 = vpop.xlane.xlu0 %897
        %v899 = vrcp.pop %v895
        %v900 = vrcp.pop %v898
        %v901 = vmul.f32 %v890, %v899
        %v902 = vmul.f32 %v892, %v900
        %v903 = vpack.c.bf16 %v901, %v901
        %v904 = vpack.c.bf16 %v902, %v902
        %905 = vrot.lane.b32.xlu0 %v789, 96
        %v906 = vpop.permute.xlu0 %905
        %v909 = vsel %vm756, %v903, 0
        %911 = vmatpush.bf16.msra.mxu0 0
        %912 = vmatpush.bf16.msra.mxu0 0
        %913 = vmatpush.bf16.msra.mxu0 0
        %914 = vmatpush.bf16.msra.mxu0 0
        %915 = vmatpush.bf16.msra.mxu0 0
        %916 = vmatpush.bf16.msra.mxu0 0
        %917 = vmatpush.bf16.msra.mxu0 0
        %918 = vmatpush.bf16.msra.mxu0 %v906
        %919 = vmatmul.bf16.gmra.mxu0 %v909
        %v920 = vpop.f32.mrf.mxu0
        %v921 = vadd.f32 0.0, %v920
        %v922 = vpop.f32.mrf.mxu0
        %923 = vdwg.mxu0
        %924 = vrot.lane.b32.xlu0 %v811, 96
        %v925 = vpop.permute.xlu0 %924
        %v928 = vsel %vm756, %v904, 0
        %930 = vmatpush.bf16.msra.mxu0 0
        %931 = vmatpush.bf16.msra.mxu0 0
        %932 = vmatpush.bf16.msra.mxu0 0
        %933 = vmatpush.bf16.msra.mxu0 0
        %934 = vmatpush.bf16.msra.mxu0 0
        %935 = vmatpush.bf16.msra.mxu0 0
        %936 = vmatpush.bf16.msra.mxu0 0
        %937 = vmatpush.bf16.msra.mxu0 %v925
        %938 = vmatmul.bf16.gmra.mxu0 %v928
        %v939 = vpop.f32.mrf.mxu0
        %v940 = vadd.f32 0.0, %v939
        %v941 = vpop.f32.mrf.mxu0
        %942 = vdwg.mxu0
        %943 = vrot.lane.b32.xlu0 %v831, 64
        %v944 = vpop.permute.xlu0 %943
        %945 = vrot.lane.b32.xlu0 %v711, 64
        %v946 = vpop.permute.xlu0 %945
        %v948 = vsel %vm712, %v944, 0
        %v951 = vsel %vm712, %v946, 0
        %953 = vmatpush.bf16.xpose.msra.mxu0 0
        %954 = vmatpush.bf16.xpose.msra.mxu0 0
        %955 = vmatpush.bf16.xpose.msra.mxu0 0
        %956 = vmatpush.bf16.xpose.msra.mxu0 0
        %957 = vmatpush.bf16.xpose.msra.mxu0 0
        %958 = vmatpush.bf16.xpose.msra.mxu0 0
        %959 = vmatpush.bf16.xpose.msra.mxu0 0
        %960 = vmatpush.bf16.xpose.msra.mxu0 %v951
        %961 = vmatmul.bf16.gmra.mxu0 %v948
        %v962 = vpop.f32.mrf.mxu0
        %v963 = vadd.f32 0.0, %v962
        %v964 = vpop.f32.mrf.mxu0
        %965 = vdwg.mxu0
        %966 = vrot.lane.b32.xlu0 %v857, 64
        %v967 = vpop.permute.xlu0 %966
        %968 = vrot.lane.b32.xlu0 %v736, 64
        %v969 = vpop.permute.xlu0 %968
        %v971 = vsel %vm712, %v967, 0
        %v974 = vsel %vm712, %v969, 0
        %976 = vmatpush.bf16.xpose.msra.mxu0 0
        %977 = vmatpush.bf16.xpose.msra.mxu0 0
        %978 = vmatpush.bf16.xpose.msra.mxu0 0
        %979 = vmatpush.bf16.xpose.msra.mxu0 0
        %980 = vmatpush.bf16.xpose.msra.mxu0 0
        %981 = vmatpush.bf16.xpose.msra.mxu0 0
        %982 = vmatpush.bf16.xpose.msra.mxu0 0
        %983 = vmatpush.bf16.xpose.msra.mxu0 %v974
        %984 = vmatmul.bf16.gmra.mxu0 %v971
        %v985 = vpop.f32.mrf.mxu0
        %v986 = vadd.f32 0.0, %v985
        %v987 = vpop.f32.mrf.mxu0
        %988 = vdwg.mxu0
        %v989 = vsel %vm756, %v963, -inf
        %990 = vmax.xlane.f32.xlu0 %v989
        %v991 = vpop.xlane.xlu0 %990
        %v992 = vsel %vm756, %v986, -inf
        %993 = vmax.xlane.f32.xlu0 %v992
        %v994 = vpop.xlane.xlu0 %993
        %v995 = vsub.f32 %v963, %v991
        %v996 = vsub.f32 %v986, %v994
        %v997 = vmul.f32 %v995, 1.442695
        %v998 = vpow.pop %v997
        %v999 = vmul.f32 %v996, 1.442695
        %v1000 = vpow.pop %v999
        %v1001 = vsel %vm756, %v998, 0.0
        %1002 = vadd.xlane.f32.xlu0 %v1001
        %v1003 = vpop.xlane.xlu0 %1002
        %v1004 = vsel %vm756, %v1000, 0.0
        %1005 = vadd.xlane.f32.xlu0 %v1004
        %v1006 = vpop.xlane.xlu0 %1005
        %v1007 = vrcp.pop %v1003
        %v1008 = vrcp.pop %v1006
        %v1009 = vmul.f32 %v998, %v1007
        %v1010 = vmul.f32 %v1000, %v1008
        %v1011 = vpack.c.bf16 %v1009, %v1009
        %v1012 = vpack.c.bf16 %v1010, %v1010
        %1013 = vrot.lane.b32.xlu0 %v789, 64
        %v1014 = vpop.permute.xlu0 %1013
        %v1017 = vsel %vm756, %v1011, 0
        %1019 = vmatpush.bf16.msra.mxu0 0
        %1020 = vmatpush.bf16.msra.mxu0 0
        %1021 = vmatpush.bf16.msra.mxu0 0
        %1022 = vmatpush.bf16.msra.mxu0 0
        %1023 = vmatpush.bf16.msra.mxu0 0
        %1024 = vmatpush.bf16.msra.mxu0 0
        %1025 = vmatpush.bf16.msra.mxu0 0
        %1026 = vmatpush.bf16.msra.mxu0 %v1014
        %1027 = vmatmul.bf16.gmra.mxu0 %v1017
        %v1028 = vpop.f32.mrf.mxu0
        %v1029 = vadd.f32 0.0, %v1028
        %v1030 = vpop.f32.mrf.mxu0
        %1031 = vdwg.mxu0
        %1032 = vrot.lane.b32.xlu0 %v811, 64
        %v1033 = vpop.permute.xlu0 %1032
        %v1036 = vsel %vm756, %v1012, 0
        %1038 = vmatpush.bf16.msra.mxu0 0
        %1039 = vmatpush.bf16.msra.mxu0 0
        %1040 = vmatpush.bf16.msra.mxu0 0
        %1041 = vmatpush.bf16.msra.mxu0 0
        %1042 = vmatpush.bf16.msra.mxu0 0
        %1043 = vmatpush.bf16.msra.mxu0 0
        %1044 = vmatpush.bf16.msra.mxu0 0
        %1045 = vmatpush.bf16.msra.mxu0 %v1033
        %1046 = vmatmul.bf16.gmra.mxu0 %v1036
        %v1047 = vpop.f32.mrf.mxu0
        %v1048 = vadd.f32 0.0, %v1047
        %v1049 = vpop.f32.mrf.mxu0
        %1050 = vdwg.mxu0
        %1051 = vrot.lane.b32.xlu0 %v831, 32
        %v1052 = vpop.permute.xlu0 %1051
        %1053 = vrot.lane.b32.xlu0 %v711, 32
        %v1054 = vpop.permute.xlu0 %1053
        %v1056 = vsel %vm712, %v1052, 0
        %v1059 = vsel %vm712, %v1054, 0
        %1061 = vmatpush.bf16.xpose.msra.mxu0 0
        %1062 = vmatpush.bf16.xpose.msra.mxu0 0
        %1063 = vmatpush.bf16.xpose.msra.mxu0 0
        %1064 = vmatpush.bf16.xpose.msra.mxu0 0
        %1065 = vmatpush.bf16.xpose.msra.mxu0 0
        %1066 = vmatpush.bf16.xpose.msra.mxu0 0
        %1067 = vmatpush.bf16.xpose.msra.mxu0 0
        %1068 = vmatpush.bf16.xpose.msra.mxu0 %v1059
        %1069 = vmatmul.bf16.gmra.mxu0 %v1056
        %v1070 = vpop.f32.mrf.mxu0
        %v1071 = vadd.f32 0.0, %v1070
        %v1072 = vpop.f32.mrf.mxu0
        %1073 = vdwg.mxu0
        %1074 = vrot.lane.b32.xlu0 %v857, 32
        %v1075 = vpop.permute.xlu0 %1074
        %1076 = vrot.lane.b32.xlu0 %v736, 32
        %v1077 = vpop.permute.xlu0 %1076
        %v1079 = vsel %vm712, %v1075, 0
        %v1082 = vsel %vm712, %v1077, 0
        %1084 = vmatpush.bf16.xpose.msra.mxu0 0
        %1085 = vmatpush.bf16.xpose.msra.mxu0 0
        %1086 = vmatpush.bf16.xpose.msra.mxu0 0
        %1087 = vmatpush.bf16.xpose.msra.mxu0 0
        %1088 = vmatpush.bf16.xpose.msra.mxu0 0
        %1089 = vmatpush.bf16.xpose.msra.mxu0 0
        %1090 = vmatpush.bf16.xpose.msra.mxu0 0
        %1091 = vmatpush.bf16.xpose.msra.mxu0 %v1082
        %1092 = vmatmul.bf16.gmra.mxu0 %v1079
        %v1093 = vpop.f32.mrf.mxu0
        %v1094 = vadd.f32 0.0, %v1093
        %v1095 = vpop.f32.mrf.mxu0
        %1096 = vdwg.mxu0
        %v1097 = vsel %vm756, %v1071, -inf
        %1098 = vmax.xlane.f32.xlu0 %v1097
        %v1099 = vpop.xlane.xlu0 %1098
        %v1100 = vsel %vm756, %v1094, -inf
        %1101 = vmax.xlane.f32.xlu0 %v1100
        %v1102 = vpop.xlane.xlu0 %1101
        %v1103 = vsub.f32 %v1071, %v1099
        %v1104 = vsub.f32 %v1094, %v1102
        %v1105 = vmul.f32 %v1103, 1.442695
        %v1106 = vpow.pop %v1105
        %v1107 = vmul.f32 %v1104, 1.442695
        %v1108 = vpow.pop %v1107
        %v1109 = vsel %vm756, %v1106, 0.0
        %1110 = vadd.xlane.f32.xlu0 %v1109
        %v1111 = vpop.xlane.xlu0 %1110
        %v1112 = vsel %vm756, %v1108, 0.0
        %1113 = vadd.xlane.f32.xlu0 %v1112
        %v1114 = vpop.xlane.xlu0 %1113
        %v1115 = vrcp.pop %v1111
        %v1116 = vrcp.pop %v1114
        %v1117 = vmul.f32 %v1106, %v1115
        %v1118 = vmul.f32 %v1108, %v1116
        %v1119 = vpack.c.bf16 %v1117, %v1117
        %v1120 = vpack.c.bf16 %v1118, %v1118
        %1121 = vrot.lane.b32.xlu0 %v789, 32
        %v1122 = vpop.permute.xlu0 %1121
        %v1125 = vsel %vm756, %v1119, 0
        %1127 = vmatpush.bf16.msra.mxu0 0
        %1128 = vmatpush.bf16.msra.mxu0 0
        %1129 = vmatpush.bf16.msra.mxu0 0
        %1130 = vmatpush.bf16.msra.mxu0 0
        %1131 = vmatpush.bf16.msra.mxu0 0
        %1132 = vmatpush.bf16.msra.mxu0 0
        %1133 = vmatpush.bf16.msra.mxu0 0
        %1134 = vmatpush.bf16.msra.mxu0 %v1122
        %1135 = vmatmul.bf16.gmra.mxu0 %v1125
        %v1136 = vpop.f32.mrf.mxu0
        %v1137 = vadd.f32 0.0, %v1136
        %v1138 = vpop.f32.mrf.mxu0
        %1139 = vdwg.mxu0
        %1140 = vrot.lane.b32.xlu0 %v811, 32
        %v1141 = vpop.permute.xlu0 %1140
        %v1144 = vsel %vm756, %v1120, 0
        %1146 = vmatpush.bf16.msra.mxu0 0
        %1147 = vmatpush.bf16.msra.mxu0 0
        %1148 = vmatpush.bf16.msra.mxu0 0
        %1149 = vmatpush.bf16.msra.mxu0 0
        %1150 = vmatpush.bf16.msra.mxu0 0
        %1151 = vmatpush.bf16.msra.mxu0 0
        %1152 = vmatpush.bf16.msra.mxu0 0
        %1153 = vmatpush.bf16.msra.mxu0 %v1141
        %1154 = vmatmul.bf16.gmra.mxu0 %v1144
        %v1155 = vpop.f32.mrf.mxu0
        %v1156 = vadd.f32 0.0, %v1155
        %v1157 = vpop.f32.mrf.mxu0
        %1158 = vdwg.mxu0
        %1161 = vrot.lane.b32.xlu0 %v921, 32
        %v1162 = vpop.permute.xlu0 %1161
        %1163 = vrot.lane.b32.xlu0 %v940, 32
        %v1164 = vpop.permute.xlu0 %1163
        %1169 = vrot.lane.b32.xlu0 %v1029, 64
        %v1170 = vpop.permute.xlu0 %1169
        %1171 = vrot.lane.b32.xlu0 %v1048, 64
        %v1172 = vpop.permute.xlu0 %1171
        %1177 = vrot.lane.b32.xlu0 %v1137, 96
        %v1178 = vpop.permute.xlu0 %1177
        %1179 = vrot.lane.b32.xlu0 %v1156, 96
        %v1180 = vpop.permute.xlu0 %1179
        %v1183 = vsel %vm712, %v804, %v1162
        %v1184 = vsel %vm712, %v826, %v1164
        %vm1185 = vcmask 523264
        %v1186 = vsel %vm1185, %v1183, %v1170
        %v1187 = vsel %vm1185, %v1184, %v1172
        %vm1188 = vcmask 785408
        %v1189 = vsel %vm1188, %v1186, %v1178
        %v1190 = vsel %vm1188, %v1187, %v1180
        %v1191 = vpack.c.bf16 %v1190, %v1189
        %v1192 = vld [vmem:[#allocation10] sm:$0xf]
        %v1193 = vld [vmem:[#allocation10 + $0x4] sm:$0xf]
        %v1194 = vld [vmem:[#allocation10 + $0x8] sm:$0xf]
        %v1195 = vld [vmem:[#allocation10 + $0xc] sm:$0xf]
        %v1196 = vld [vmem:[#allocation10 + $0x10] sm:$0xf]
        %v1197 = vld [vmem:[#allocation10 + $0x14] sm:$0xf]
        %v1198 = vld [vmem:[#allocation10 + $0x18] sm:$0xf]
        %v1199 = vld [vmem:[#allocation10 + $0x1c] sm:$0xf]
        %v1200 = vld [vmem:[#allocation10 + $0x20] sm:$0xf]
        %v1201 = vld [vmem:[#allocation10 + $0x24] sm:$0xf]
        %v1202 = vld [vmem:[#allocation10 + $0x28] sm:$0xf]
        %v1203 = vld [vmem:[#allocation10 + $0x2c] sm:$0xf]
        %v1204 = vld [vmem:[#allocation10 + $0x30] sm:$0xf]
        %v1205 = vld [vmem:[#allocation10 + $0x34] sm:$0xf]
        %v1206 = vld [vmem:[#allocation10 + $0x38] sm:$0xf]
        %v1207 = vld [vmem:[#allocation10 + $0x3c] sm:$0xf]
        %v1208 = vperm.slane %v459, 0
        %v1225 = vunpack.c.l.b16 %v1192
        %v1226 = vunpack.c.l.b16 %v1193
        %v1227 = vunpack.c.l.b16 %v1194
        %v1228 = vunpack.c.l.b16 %v1195
        %v1229 = vunpack.c.l.b16 %v1196
        %v1230 = vunpack.c.l.b16 %v1197
        %v1231 = vunpack.c.l.b16 %v1198
        %v1232 = vunpack.c.l.b16 %v1199
        %v1233 = vunpack.c.l.b16 %v1200
        %v1234 = vunpack.c.l.b16 %v1201
        %v1235 = vunpack.c.l.b16 %v1202
        %v1236 = vunpack.c.l.b16 %v1203
        %v1237 = vunpack.c.l.b16 %v1204
        %v1238 = vunpack.c.l.b16 %v1205
        %v1239 = vunpack.c.l.b16 %v1206
        %v1240 = vunpack.c.l.b16 %v1207
        %v1241 = vpack.c.b16 %v1226, %v1225
        %v1242 = vpack.c.b16 %v1228, %v1227
        %v1243 = vpack.c.b16 %v1230, %v1229
        %v1244 = vpack.c.b16 %v1232, %v1231
        %v1245 = vpack.c.b16 %v1234, %v1233
        %v1246 = vpack.c.b16 %v1236, %v1235
        %v1247 = vpack.c.b16 %v1238, %v1237
        %v1248 = vpack.c.b16 %v1240, %v1239
        %1257 = vmatpush.bf16.msra.mxu0 %v1248
        %1258 = vmatpush.bf16.msra.mxu0 %v1247
        %1259 = vmatpush.bf16.msra.mxu0 %v1246
        %1260 = vmatpush.bf16.msra.mxu0 %v1245
        %1261 = vmatpush.bf16.msra.mxu0 %v1244
        %1262 = vmatpush.bf16.msra.mxu0 %v1243
        %1263 = vmatpush.bf16.msra.mxu0 %v1242
        %1264 = vmatpush.bf16.msra.mxu0 %v1241
        %1265 = vmatmul.bf16.gmra.mxu0 %v1191
        %v1266 = vpop.f32.mrf.mxu0
        %v1267 = vadd.f32 %v1208, %v1266
        %v1268 = vpop.f32.mrf.mxu0
        %v1269 = vadd.f32 %v1208, %v1268
        %1270 = vdwg.mxu0
        %1271 = vst [vmem:[%s400] sm:$0xff] %v1267
        %1272 = vst [vmem:[%s400 + $0x8] sm:$0xff] %v1269
        %s1273 = sand.u32 %s177, 1
        %s1274 = scalar_lea.sflag [#allocation4], %s1273
        %s1275 = sand.u32 %s177, 1
        %s1276 = smul.addr %s1275, 16
        %s1277 = scalar_lea.vmem [#allocation13], %s1276
        // Predicated region
        $region69: #{tpu_custom_call.1} parent=43 // pred_check
          %p1278 = pneg %p187
        $region70: #{tpu_custom_call.1} parent=43 // pred_check_branch
          %1280 = sbr.rel (%p1278) target = $region72
        $region71: #{tpu_custom_call.1} parent=43 // pred_region
          %s1281 = smul.u32 2, %s28
          %1283 = vsyncadd %s1274, 0
          %s1284 = smul.addr %s1281, 8
          %s1285 = scalar_lea.hbm %s6, %s1284
          %s1286 = sshll.u32 %s1277, 4
          %s1287 = int_to_ptr.vmem [resolvable:$true] %s1286
          %s1288 = sshll.u32 %s1285, 4
          %s1289 = int_to_ptr.hbm [resolvable:$true] %s1288
          %1294 = dma.vmem_to_hbm [thread:$0]  %s1287, 256, %s1289, %s1274, 128, 128, 8
        $region72: #{tpu_custom_call.1} parent=43 // pred_fallthru
          _
      $region44: #{tpu_custom_call.1} parent=5 // pred_fallthru
        _
      %p1295 = scmp.le.s32.totalorder 2, %s23
      // Predicated region
      $region73: #{tpu_custom_call.1} parent=5 // pred_check
        %p1296 = pneg %p1295
      $region74: #{tpu_custom_call.1} parent=5 // pred_check_branch
        %1298 = sbr.rel (%p1296) target = $region76
      $region75: #{tpu_custom_call.1} parent=5 // pred_region
        %s1299 = ssub.s32 %s23, 2
        // Predicated region
        $region77: #{tpu_custom_call.1} parent=75 // pred_check
          %p1300 = pneg %p193
        $region78: #{tpu_custom_call.1} parent=75 // pred_check_branch
          %1302 = sbr.rel (%p1300) target = $region80
        $region79: #{tpu_custom_call.1} parent=75 // pred_region
          %s1303 = sand.u32 %s178, 1
          %s1304 = scalar_lea.sflag [#allocation4], %s1303
          %s1305 = sand.u32 %s178, 1
          %s1306 = smul.addr %s1305, 16
          %s1307 = scalar_lea.vmem [#allocation13], %s1306
          %1309 = dma.done %s1304, 256
        $region80: #{tpu_custom_call.1} parent=75 // pred_fallthru
          _
      $region76: #{tpu_custom_call.1} parent=5 // pred_fallthru
        _
    $region6: #{tpu_custom_call.1} parent=1 // loop_footer
      %s27 = sadd.s32 1, %s23
    $region7: #{tpu_custom_call.1} parent=1 // loop_footer_branch
      %22 = sbr.rel target = $region3
    $region8: #{tpu_custom_call.1} parent=1 // loop_exit
      _
    %1310 = vsyncpa [#allocation3], 1
    %s1311 = scalar_lea.sflag [#allocation3], 1
    %1312 = vsyncpa %s1311, 1
    %1313 = vsyncpa [#allocation6], 1
    %s1314 = scalar_lea.sflag [#allocation6], 1
    %1315 = vsyncpa %s1314, 1
    %1316 = vsyncpa [#allocation9], 1
    %1317 = vsyncpa [#allocation12], 1
    %1318 = vsyncpa [#allocation4], 1
    %s1319 = scalar_lea.sflag [#allocation4], 1
    %1320 = vsyncpa %s1319, 1

</llo_original>
